<compile_context>
chip_gen: v7x
topology: tpu7x:2x2x1
jax: 0.10.0
libtpu: 0.0.40
codegen_flags: <defaults>
</compile_context>

<pallas_src>
import jax
import jax.numpy as jnp
from jax.experimental import pallas as pl
from jax.experimental.pallas import tpu as pltpu

EPS = 1e-5

_NPARAM = 8                      # packed per-row params, padded to 8 lanes
_COL_GT, _COL_GS, _COL_DB = 0, 1, 2   # gamma_t, gamma_s, beta_t - beta_s


def _round_up(x, m):
    return (x + m - 1) // m * m


def _build_kernel(metas):
    """metas[i] = dict(offset, steps, inv_s, coef) for used layer i (Python consts)."""

    def kernel(*refs):
        out_ref = refs[-1]
        g = pl.program_id(0)

        @pl.when(g == 0)
        def _init():
            out_ref[...] = jnp.zeros_like(out_ref)

        for li, m in enumerate(metas):
            xt_ref = refs[3 * li + 0]
            xs_ref = refs[3 * li + 1]
            p_ref = refs[3 * li + 2]
            off, steps = m["offset"], m["steps"]

            @pl.when(jnp.logical_and(g >= off, g < off + steps))
            def _layer(xt_ref=xt_ref, xs_ref=xs_ref, p_ref=p_ref,
                       inv_s=m["inv_s"], coef=m["coef"]):
                xt = xt_ref[...].astype(jnp.float32)       # (TR, S) cast in-kernel
                xs = xs_ref[...].astype(jnp.float32)
                p = p_ref[...]                             # (TR, 8) float32
                g_t = p[:, _COL_GT:_COL_GT + 1]
                g_s = p[:, _COL_GS:_COL_GS + 1]
                d_b = p[:, _COL_DB:_COL_DB + 1]            # beta_t - beta_s

                def in_mean_minus_beta(x, gam):
                    # one-pass moments -> biased variance (InstanceNorm2d semantics)
                    s1 = jnp.sum(x, axis=1, keepdims=True)
                    s2 = jnp.sum(x * x, axis=1, keepdims=True)
                    mu = s1 * inv_s
                    var = jnp.maximum(s2 * inv_s - mu * mu, 0.0)
                    # centered spatial mean; lanes are never padded -> no mask
                    c = jnp.sum(x - mu, axis=1, keepdims=True) * inv_s
                    # == mean_{H,W}( gam*(x-mu)*rsqrt(var+eps) + beta ) - beta
                    return gam * c * jax.lax.rsqrt(var + EPS)

                diff = (in_mean_minus_beta(xt, g_t)
                        - in_mean_minus_beta(xs, g_s)
                        + d_b)                              # (TR, 1)
                out_ref[...] += coef * jnp.sum(jnp.abs(diff), axis=(0, 1),
                                               keepdims=True)

    return kernel


def medium_distill_mse_loss(feats_t, feats_s, params_t, params_s,
                            weights=(1.0, 1.0, 1.0, 0.0),
                            analytic_shortcut=False,
                            vmem_feature_budget=16 * 1024 * 1024):
    """Weighted sum over layers of |IN_t(x_t).mean(2,3) - IN_s(x_s).mean(2,3)|.mean()."""
    assert len(feats_t) == len(feats_s) == len(params_t) == len(params_s) == len(weights)

    # drop zero-weight layers at trace time
    used = [i for i, w in enumerate(weights) if float(w) != 0.0]
    if not used:
        return jnp.float32(0.0)

    if analytic_shortcut:
        # spatial mean of an instance-normalized map is exactly beta
        loss = jnp.float32(0.0)
        for i in used:
            b_t = jnp.asarray(params_t[i][1], jnp.float32)
            b_s = jnp.asarray(params_s[i][1], jnp.float32)
            loss = loss + jnp.float32(weights[i]) * jnp.mean(jnp.abs(b_t - b_s))
        return loss

    # Budget: all layers' (teacher, student) double-buffers coexist in VMEM.
    blk_cap = max(64 * 1024, vmem_feature_budget // (len(used) * 2 * 2))

    operands, in_specs, metas = [], [], []
    offset = 0
    for i in used:
        n, c, h, w = feats_t[i].shape
        assert feats_s[i].shape == feats_t[i].shape
        r, s = n * c, h * w
        xt2 = feats_t[i].reshape(r, s)       # free reshape, no copy / no pad on lanes
        xs2 = feats_s[i].reshape(r, s)

        r_pad = _round_up(r, 8)
        if r_pad != r:                       # rare: only if N*C is not a multiple of 8
            xt2 = jnp.pad(xt2, ((0, r_pad - r), (0, 0)))
            xs2 = jnp.pad(xs2, ((0, r_pad - r), (0, 0)))

        itemsize = max(jnp.dtype(xt2.dtype).itemsize, jnp.dtype(xs2.dtype).itemsize)
        tr_cap = max(8, (blk_cap // (s * itemsize)) // 8 * 8)
        tr, d = 8, 8                         # largest multiple of 8 dividing r_pad <= cap
        while d <= min(r_pad, tr_cap):
            if r_pad % d == 0:
                tr = d
            d += 8
        steps = r_pad // tr

        g_t = jnp.asarray(params_t[i][0], jnp.float32)
        b_t = jnp.asarray(params_t[i][1], jnp.float32)
        g_s = jnp.asarray(params_s[i][0], jnp.float32)
        b_s = jnp.asarray(params_s[i][1], jnp.float32)
        pcols = jnp.stack([jnp.tile(g_t, n), jnp.tile(g_s, n),
                           jnp.tile(b_t - b_s, n)], axis=1)          # (r, 3)
        pcols = jnp.pad(pcols, ((0, r_pad - r), (0, _NPARAM - 3)))   # (r_pad, 8)

        def idx_map(g, off=offset, last=steps - 1):
            # clamp to this layer's segment: inactive steps keep the same block
            # index, so no re-DMA outside the segment.
            return (jnp.clip(g - off, 0, last), 0)

        operands += [xt2, xs2, pcols]
        in_specs += [pl.BlockSpec((tr, s), idx_map),
                     pl.BlockSpec((tr, s), idx_map),
                     pl.BlockSpec((tr, _NPARAM), idx_map)]
        metas.append(dict(offset=offset, steps=steps,
                          inv_s=1.0 / float(s), coef=float(weights[i]) / float(r)))
        offset += steps

    out = pl.pallas_call(
        _build_kernel(metas),
        out_shape=jax.ShapeDtypeStruct((1, 1), jnp.float32),
        grid=(offset,),
        in_specs=in_specs,
        out_specs=pl.BlockSpec((1, 1), lambda g: (0, 0)),
        compiler_params=pltpu.CompilerParams(
            dimension_semantics=("arbitrary",),
            vmem_limit_bytes=32 * 1024 * 1024),
    )(*operands)
    return out[0, 0]


def _reference_loss(feats_t, feats_s, params_t, params_s, weights):
    """Pure-JAX reference mirroring the PyTorch forward."""
    def inorm(x, g, b):
        mu = x.mean(axis=(2, 3), keepdims=True)
        var = ((x - mu) ** 2).mean(axis=(2, 3), keepdims=True)
        xhat = (x - mu) / jnp.sqrt(var + EPS)
        return g[None, :, None, None] * xhat + b[None, :, None, None]

    loss = jnp.float32(0.0)
    for i in range(len(feats_t)):
        t = inorm(feats_t[i], *params_t[i])
        s = inorm(feats_s[i], *params_s[i])
        loss = jnp.abs(t.mean(axis=(2, 3)) - s.mean(axis=(2, 3))).mean() * weights[i] + loss
    return loss


if __name__ == "__main__":
    key = jax.random.PRNGKey(0)
    layer_shapes = [(2, 4, 16, 16), (2, 8, 8, 8), (2, 16, 4, 4), (2, 32, 2, 2)]
    weights = [1.0, 1.0, 1.0, 0.0]

    feats_t, feats_s, params_t, params_s = [], [], [], []
    for shp in layer_shapes:
        key, k1, k2, k3, k4, k5, k6 = jax.random.split(key, 7)
        feats_t.append(jax.random.normal(k1, shp, dtype=jnp.float32))
        feats_s.append(jax.random.normal(k2, shp, dtype=jnp.float32))
        c = shp[1]
        # synthetic affine instance-norm params (gamma, beta) per domain norm
        params_t.append((1.0 + 0.1 * jax.random.normal(k3, (c,), dtype=jnp.float32),
                         0.1 * jax.random.normal(k4, (c,), dtype=jnp.float32)))
        params_s.append((1.0 + 0.1 * jax.random.normal(k5, (c,), dtype=jnp.float32),
                         0.1 * jax.random.normal(k6, (c,), dtype=jnp.float32)))

    loss = medium_distill_mse_loss(feats_t, feats_s, params_t, params_s, weights)
    loss = jax.block_until_ready(loss)

    ref = _reference_loss(feats_t, feats_s, params_t, params_s, weights)
    assert abs(float(loss) - float(ref)) < 1e-4, (float(loss), float(ref))

    # closed-form path (spatial mean of an IN output == beta)
    short = medium_distill_mse_loss(feats_t, feats_s, params_t, params_s, weights,
                                    analytic_shortcut=True)
    assert abs(float(short) - float(ref)) < 1e-4, (float(short), float(ref))

    print("KERNEL_OK")
</pallas_src>

<mosaic_0001>
module attributes {stable_mosaic.version = 11 : i64} {
  func.func @kernel(%arg0: i32, %arg1: memref<8x256xf32, #tpu.memory_space<vmem>>, %arg2: memref<8x256xf32, #tpu.memory_space<vmem>>, %arg3: memref<8x8xf32, #tpu.memory_space<vmem>>, %arg4: memref<16x64xf32, #tpu.memory_space<vmem>>, %arg5: memref<16x64xf32, #tpu.memory_space<vmem>>, %arg6: memref<16x8xf32, #tpu.memory_space<vmem>>, %arg7: memref<32x16xf32, #tpu.memory_space<vmem>>, %arg8: memref<32x16xf32, #tpu.memory_space<vmem>>, %arg9: memref<32x8xf32, #tpu.memory_space<vmem>>, %arg10: memref<1x1xf32, #tpu.memory_space<vmem>>) attributes {dimension_semantics = [#tpu.dimension_semantics<arbitrary>], iteration_bounds = array<i64: 3>, scalar_prefetch = 0 : i64, scratch_operands = 0 : i64, tpu.core_type = #tpu.core_type<tc>, window_params = [{transform_indices = @transform_0, window_bounds = array<i64: 8, 256>}, {transform_indices = @transform_1, window_bounds = array<i64: 8, 256>}, {transform_indices = @transform_2, window_bounds = array<i64: 8, 8>}, {transform_indices = @transform_3, window_bounds = array<i64: 16, 64>}, {transform_indices = @transform_4, window_bounds = array<i64: 16, 64>}, {transform_indices = @transform_5, window_bounds = array<i64: 16, 8>}, {transform_indices = @transform_6, window_bounds = array<i64: 32, 16>}, {transform_indices = @transform_7, window_bounds = array<i64: 32, 16>}, {transform_indices = @transform_8, window_bounds = array<i64: 32, 8>}, {pipeline_mode = #tpu.pipeline_mode<synchronous>, transform_indices = @transform_9, window_bounds = array<i64: 1, 1>}]} {
    %c0_i32 = arith.constant 0 : i32
    %0 = arith.cmpi eq, %arg0, %c0_i32 : i32
    %1 = arith.extui %0 : i1 to i32
    %c0_i32_0 = arith.constant 0 : i32
    %2 = arith.cmpi ne, %1, %c0_i32_0 : i32
    scf.if %2 {
      %cst = arith.constant 0.000000e+00 : f32
      %18 = vector.broadcast %cst : f32 to vector<1x1xf32>
      %c0 = arith.constant 0 : index
      %c0_7 = arith.constant 0 : index
      %19 = vector.load %arg10[%c0, %c0_7] : memref<1x1xf32, #tpu.memory_space<vmem>>, vector<1x1xf32>
      tpu.vector_store %arg10[%c0, %c0_7], %18 {strides = array<i32>} : memref<1x1xf32, #tpu.memory_space<vmem>>, vector<1x1xf32>,
    } else {
    }
    %c0_i32_1 = arith.constant 0 : i32
    %3 = arith.cmpi sge, %arg0, %c0_i32_1 : i32
    %c1_i32 = arith.constant 1 : i32
    %4 = arith.cmpi slt, %arg0, %c1_i32 : i32
    %5 = arith.andi %3, %4 : i1
    %6 = arith.extui %5 : i1 to i32
    %c0_i32_2 = arith.constant 0 : i32
    %7 = arith.cmpi ne, %6, %c0_i32_2 : i32
    scf.if %7 {
      %c0 = arith.constant 0 : index
      %c0_7 = arith.constant 0 : index
      %18 = vector.load %arg1[%c0, %c0_7] : memref<8x256xf32, #tpu.memory_space<vmem>>, vector<8x256xf32>
      %c0_8 = arith.constant 0 : index
      %c0_9 = arith.constant 0 : index
      %19 = vector.load %arg2[%c0_8, %c0_9] : memref<8x256xf32, #tpu.memory_space<vmem>>, vector<8x256xf32>
      %c0_10 = arith.constant 0 : index
      %c0_11 = arith.constant 0 : index
      %20 = vector.load %arg3[%c0_10, %c0_11] : memref<8x8xf32, #tpu.memory_space<vmem>>, vector<8x8xf32>
      %21 = vector.extract_strided_slice %20 {offsets = [0, 0], sizes = [8, 1], strides = [1, 1]} : vector<8x8xf32> to vector<8x1xf32>
      %22 = vector.extract_strided_slice %20 {offsets = [0, 1], sizes = [8, 1], strides = [1, 1]} : vector<8x8xf32> to vector<8x1xf32>
      %23 = vector.extract_strided_slice %20 {offsets = [0, 2], sizes = [8, 1], strides = [1, 1]} : vector<8x8xf32> to vector<8x1xf32>
      %cst = arith.constant dense<0.000000e+00> : vector<8xf32>
      %24 = vector.multi_reduction <add>, %18, %cst [1] : vector<8x256xf32> to vector<8xf32>
      %25 = vector.shape_cast %24 : vector<8xf32> to vector<8x1xf32>
      %26 = arith.mulf %18, %18 : vector<8x256xf32>
      %cst_12 = arith.constant dense<0.000000e+00> : vector<8xf32>
      %27 = vector.multi_reduction <add>, %26, %cst_12 [1] : vector<8x256xf32> to vector<8xf32>
      %28 = vector.shape_cast %27 : vector<8xf32> to vector<8x1xf32>
      %cst_13 = arith.constant 3.906250e-03 : f32
      %29 = vector.broadcast %cst_13 : f32 to vector<8x1xf32>
      %30 = arith.mulf %25, %29 : vector<8x1xf32>
      %cst_14 = arith.constant 3.906250e-03 : f32
      %31 = vector.broadcast %cst_14 : f32 to vector<8x1xf32>
      %32 = arith.mulf %28, %31 : vector<8x1xf32>
      %33 = arith.mulf %30, %30 : vector<8x1xf32>
      %34 = arith.subf %32, %33 : vector<8x1xf32>
      %cst_15 = arith.constant 0.000000e+00 : f32
      %35 = vector.broadcast %cst_15 : f32 to vector<8x1xf32>
      %36 = arith.maximumf %34, %35 : vector<8x1xf32>
      %37 = vector.broadcast %30 : vector<8x1xf32> to vector<8x256xf32>
      %38 = arith.subf %18, %37 : vector<8x256xf32>
      %cst_16 = arith.constant dense<0.000000e+00> : vector<8xf32>
      %39 = vector.multi_reduction <add>, %38, %cst_16 [1] : vector<8x256xf32> to vector<8xf32>
      %40 = vector.shape_cast %39 : vector<8xf32> to vector<8x1xf32>
      %cst_17 = arith.constant 3.906250e-03 : f32
      %41 = vector.broadcast %cst_17 : f32 to vector<8x1xf32>
      %42 = arith.mulf %40, %41 : vector<8x1xf32>
      %43 = arith.mulf %21, %42 : vector<8x1xf32>
      %cst_18 = arith.constant 9.99999974E-6 : f32
      %44 = vector.broadcast %cst_18 : f32 to vector<8x1xf32>
      %45 = arith.addf %36, %44 : vector<8x1xf32>
      %46 = math.rsqrt %45 : vector<8x1xf32>
      %47 = arith.mulf %43, %46 : vector<8x1xf32>
      %cst_19 = arith.constant dense<0.000000e+00> : vector<8xf32>
      %48 = vector.multi_reduction <add>, %19, %cst_19 [1] : vector<8x256xf32> to vector<8xf32>
      %49 = vector.shape_cast %48 : vector<8xf32> to vector<8x1xf32>
      %50 = arith.mulf %19, %19 : vector<8x256xf32>
      %cst_20 = arith.constant dense<0.000000e+00> : vector<8xf32>
      %51 = vector.multi_reduction <add>, %50, %cst_20 [1] : vector<8x256xf32> to vector<8xf32>
      %52 = vector.shape_cast %51 : vector<8xf32> to vector<8x1xf32>
      %cst_21 = arith.constant 3.906250e-03 : f32
      %53 = vector.broadcast %cst_21 : f32 to vector<8x1xf32>
      %54 = arith.mulf %49, %53 : vector<8x1xf32>
      %cst_22 = arith.constant 3.906250e-03 : f32
      %55 = vector.broadcast %cst_22 : f32 to vector<8x1xf32>
      %56 = arith.mulf %52, %55 : vector<8x1xf32>
      %57 = arith.mulf %54, %54 : vector<8x1xf32>
      %58 = arith.subf %56, %57 : vector<8x1xf32>
      %cst_23 = arith.constant 0.000000e+00 : f32
      %59 = vector.broadcast %cst_23 : f32 to vector<8x1xf32>
      %60 = arith.maximumf %58, %59 : vector<8x1xf32>
      %61 = vector.broadcast %54 : vector<8x1xf32> to vector<8x256xf32>
      %62 = arith.subf %19, %61 : vector<8x256xf32>
      %cst_24 = arith.constant dense<0.000000e+00> : vector<8xf32>
      %63 = vector.multi_reduction <add>, %62, %cst_24 [1] : vector<8x256xf32> to vector<8xf32>
      %64 = vector.shape_cast %63 : vector<8xf32> to vector<8x1xf32>
      %cst_25 = arith.constant 3.906250e-03 : f32
      %65 = vector.broadcast %cst_25 : f32 to vector<8x1xf32>
      %66 = arith.mulf %64, %65 : vector<8x1xf32>
      %67 = arith.mulf %22, %66 : vector<8x1xf32>
      %cst_26 = arith.constant 9.99999974E-6 : f32
      %68 = vector.broadcast %cst_26 : f32 to vector<8x1xf32>
      %69 = arith.addf %60, %68 : vector<8x1xf32>
      %70 = math.rsqrt %69 : vector<8x1xf32>
      %71 = arith.mulf %67, %70 : vector<8x1xf32>
      %72 = arith.subf %47, %71 : vector<8x1xf32>
      %73 = arith.addf %72, %23 : vector<8x1xf32>
      %c0_27 = arith.constant 0 : index
      %c0_28 = arith.constant 0 : index
      %74 = vector.load %arg10[%c0_27, %c0_28] : memref<1x1xf32, #tpu.memory_space<vmem>>, vector<1x1xf32>
      %75 = math.absf %73 : vector<8x1xf32>
      %76 = vector.shape_cast %75 : vector<8x1xf32> to vector<1x8x1xf32>
      %cst_29 = arith.constant dense<0.000000e+00> : vector<1xf32>
      %77 = vector.multi_reduction <add>, %76, %cst_29 [1, 2] : vector<1x8x1xf32> to vector<1xf32>
      %78 = vector.shape_cast %77 : vector<1xf32> to vector<1x1x1xf32>
      %79 = vector.extract %78[0, 0, 0] : f32 from vector<1x1x1xf32>
      %80 = vector.broadcast %79 : f32 to vector<1x1xf32>
      %cst_30 = arith.constant 1.250000e-01 : f32
      %81 = vector.broadcast %cst_30 : f32 to vector<1x1xf32>
      %82 = arith.mulf %81, %80 : vector<1x1xf32>
      %83 = arith.addf %74, %82 : vector<1x1xf32>
      %c0_31 = arith.constant 0 : index
      %c0_32 = arith.constant 0 : index
      %84 = vector.load %arg10[%c0_31, %c0_32] : memref<1x1xf32, #tpu.memory_space<vmem>>, vector<1x1xf32>
      tpu.vector_store %arg10[%c0_31, %c0_32], %83 {strides = array<i32>} : memref<1x1xf32, #tpu.memory_space<vmem>>, vector<1x1xf32>,
    } else {
    }
    %c1_i32_3 = arith.constant 1 : i32
    %8 = arith.cmpi sge, %arg0, %c1_i32_3 : i32
    %c2_i32 = arith.constant 2 : i32
    %9 = arith.cmpi slt, %arg0, %c2_i32 : i32
    %10 = arith.andi %8, %9 : i1
    %11 = arith.extui %10 : i1 to i32
    %c0_i32_4 = arith.constant 0 : i32
    %12 = arith.cmpi ne, %11, %c0_i32_4 : i32
    scf.if %12 {
      %c0 = arith.constant 0 : index
      %c0_7 = arith.constant 0 : index
      %18 = vector.load %arg4[%c0, %c0_7] : memref<16x64xf32, #tpu.memory_space<vmem>>, vector<16x64xf32>
      %c0_8 = arith.constant 0 : index
      %c0_9 = arith.constant 0 : index
      %19 = vector.load %arg5[%c0_8, %c0_9] : memref<16x64xf32, #tpu.memory_space<vmem>>, vector<16x64xf32>
      %c0_10 = arith.constant 0 : index
      %c0_11 = arith.constant 0 : index
      %20 = vector.load %arg6[%c0_10, %c0_11] : memref<16x8xf32, #tpu.memory_space<vmem>>, vector<16x8xf32>
      %21 = vector.extract_strided_slice %20 {offsets = [0, 0], sizes = [16, 1], strides = [1, 1]} : vector<16x8xf32> to vector<16x1xf32>
      %22 = vector.extract_strided_slice %20 {offsets = [0, 1], sizes = [16, 1], strides = [1, 1]} : vector<16x8xf32> to vector<16x1xf32>
      %23 = vector.extract_strided_slice %20 {offsets = [0, 2], sizes = [16, 1], strides = [1, 1]} : vector<16x8xf32> to vector<16x1xf32>
      %cst = arith.constant dense<0.000000e+00> : vector<16xf32>
      %24 = vector.multi_reduction <add>, %18, %cst [1] : vector<16x64xf32> to vector<16xf32>
      %25 = vector.shape_cast %24 : vector<16xf32> to vector<16x1xf32>
      %26 = arith.mulf %18, %18 : vector<16x64xf32>
      %cst_12 = arith.constant dense<0.000000e+00> : vector<16xf32>
      %27 = vector.multi_reduction <add>, %26, %cst_12 [1] : vector<16x64xf32> to vector<16xf32>
      %28 = vector.shape_cast %27 : vector<16xf32> to vector<16x1xf32>
      %cst_13 = arith.constant 1.562500e-02 : f32
      %29 = vector.broadcast %cst_13 : f32 to vector<16x1xf32>
      %30 = arith.mulf %25, %29 : vector<16x1xf32>
      %cst_14 = arith.constant 1.562500e-02 : f32
      %31 = vector.broadcast %cst_14 : f32 to vector<16x1xf32>
      %32 = arith.mulf %28, %31 : vector<16x1xf32>
      %33 = arith.mulf %30, %30 : vector<16x1xf32>
      %34 = arith.subf %32, %33 : vector<16x1xf32>
      %cst_15 = arith.constant 0.000000e+00 : f32
      %35 = vector.broadcast %cst_15 : f32 to vector<16x1xf32>
      %36 = arith.maximumf %34, %35 : vector<16x1xf32>
      %37 = vector.broadcast %30 : vector<16x1xf32> to vector<16x64xf32>
      %38 = arith.subf %18, %37 : vector<16x64xf32>
      %cst_16 = arith.constant dense<0.000000e+00> : vector<16xf32>
      %39 = vector.multi_reduction <add>, %38, %cst_16 [1] : vector<16x64xf32> to vector<16xf32>
      %40 = vector.shape_cast %39 : vector<16xf32> to vector<16x1xf32>
      %cst_17 = arith.constant 1.562500e-02 : f32
      %41 = vector.broadcast %cst_17 : f32 to vector<16x1xf32>
      %42 = arith.mulf %40, %41 : vector<16x1xf32>
      %43 = arith.mulf %21, %42 : vector<16x1xf32>
      %cst_18 = arith.constant 9.99999974E-6 : f32
      %44 = vector.broadcast %cst_18 : f32 to vector<16x1xf32>
      %45 = arith.addf %36, %44 : vector<16x1xf32>
      %46 = math.rsqrt %45 : vector<16x1xf32>
      %47 = arith.mulf %43, %46 : vector<16x1xf32>
      %cst_19 = arith.constant dense<0.000000e+00> : vector<16xf32>
      %48 = vector.multi_reduction <add>, %19, %cst_19 [1] : vector<16x64xf32> to vector<16xf32>
      %49 = vector.shape_cast %48 : vector<16xf32> to vector<16x1xf32>
      %50 = arith.mulf %19, %19 : vector<16x64xf32>
      %cst_20 = arith.constant dense<0.000000e+00> : vector<16xf32>
      %51 = vector.multi_reduction <add>, %50, %cst_20 [1] : vector<16x64xf32> to vector<16xf32>
      %52 = vector.shape_cast %51 : vector<16xf32> to vector<16x1xf32>
      %cst_21 = arith.constant 1.562500e-02 : f32
      %53 = vector.broadcast %cst_21 : f32 to vector<16x1xf32>
      %54 = arith.mulf %49, %53 : vector<16x1xf32>
      %cst_22 = arith.constant 1.562500e-02 : f32
      %55 = vector.broadcast %cst_22 : f32 to vector<16x1xf32>
      %56 = arith.mulf %52, %55 : vector<16x1xf32>
      %57 = arith.mulf %54, %54 : vector<16x1xf32>
      %58 = arith.subf %56, %57 : vector<16x1xf32>
      %cst_23 = arith.constant 0.000000e+00 : f32
      %59 = vector.broadcast %cst_23 : f32 to vector<16x1xf32>
      %60 = arith.maximumf %58, %59 : vector<16x1xf32>
      %61 = vector.broadcast %54 : vector<16x1xf32> to vector<16x64xf32>
      %62 = arith.subf %19, %61 : vector<16x64xf32>
      %cst_24 = arith.constant dense<0.000000e+00> : vector<16xf32>
      %63 = vector.multi_reduction <add>, %62, %cst_24 [1] : vector<16x64xf32> to vector<16xf32>
      %64 = vector.shape_cast %63 : vector<16xf32> to vector<16x1xf32>
      %cst_25 = arith.constant 1.562500e-02 : f32
      %65 = vector.broadcast %cst_25 : f32 to vector<16x1xf32>
      %66 = arith.mulf %64, %65 : vector<16x1xf32>
      %67 = arith.mulf %22, %66 : vector<16x1xf32>
      %cst_26 = arith.constant 9.99999974E-6 : f32
      %68 = vector.broadcast %cst_26 : f32 to vector<16x1xf32>
      %69 = arith.addf %60, %68 : vector<16x1xf32>
      %70 = math.rsqrt %69 : vector<16x1xf32>
      %71 = arith.mulf %67, %70 : vector<16x1xf32>
      %72 = arith.subf %47, %71 : vector<16x1xf32>
      %73 = arith.addf %72, %23 : vector<16x1xf32>
      %c0_27 = arith.constant 0 : index
      %c0_28 = arith.constant 0 : index
      %74 = vector.load %arg10[%c0_27, %c0_28] : memref<1x1xf32, #tpu.memory_space<vmem>>, vector<1x1xf32>
      %75 = math.absf %73 : vector<16x1xf32>
      %76 = vector.shape_cast %75 : vector<16x1xf32> to vector<1x16x1xf32>
      %cst_29 = arith.constant dense<0.000000e+00> : vector<1xf32>
      %77 = vector.multi_reduction <add>, %76, %cst_29 [1, 2] : vector<1x16x1xf32> to vector<1xf32>
      %78 = vector.shape_cast %77 : vector<1xf32> to vector<1x1x1xf32>
      %79 = vector.extract %78[0, 0, 0] : f32 from vector<1x1x1xf32>
      %80 = vector.broadcast %79 : f32 to vector<1x1xf32>
      %cst_30 = arith.constant 6.250000e-02 : f32
      %81 = vector.broadcast %cst_30 : f32 to vector<1x1xf32>
      %82 = arith.mulf %81, %80 : vector<1x1xf32>
      %83 = arith.addf %74, %82 : vector<1x1xf32>
      %c0_31 = arith.constant 0 : index
      %c0_32 = arith.constant 0 : index
      %84 = vector.load %arg10[%c0_31, %c0_32] : memref<1x1xf32, #tpu.memory_space<vmem>>, vector<1x1xf32>
      tpu.vector_store %arg10[%c0_31, %c0_32], %83 {strides = array<i32>} : memref<1x1xf32, #tpu.memory_space<vmem>>, vector<1x1xf32>,
    } else {
    }
    %c2_i32_5 = arith.constant 2 : i32
    %13 = arith.cmpi sge, %arg0, %c2_i32_5 : i32
    %c3_i32 = arith.constant 3 : i32
    %14 = arith.cmpi slt, %arg0, %c3_i32 : i32
    %15 = arith.andi %13, %14 : i1
    %16 = arith.extui %15 : i1 to i32
    %c0_i32_6 = arith.constant 0 : i32
    %17 = arith.cmpi ne, %16, %c0_i32_6 : i32
    scf.if %17 {
      %c0 = arith.constant 0 : index
      %c0_7 = arith.constant 0 : index
      %18 = vector.load %arg7[%c0, %c0_7] : memref<32x16xf32, #tpu.memory_space<vmem>>, vector<32x16xf32>
      %c0_8 = arith.constant 0 : index
      %c0_9 = arith.constant 0 : index
      %19 = vector.load %arg8[%c0_8, %c0_9] : memref<32x16xf32, #tpu.memory_space<vmem>>, vector<32x16xf32>
      %c0_10 = arith.constant 0 : index
      %c0_11 = arith.constant 0 : index
      %20 = vector.load %arg9[%c0_10, %c0_11] : memref<32x8xf32, #tpu.memory_space<vmem>>, vector<32x8xf32>
      %21 = vector.extract_strided_slice %20 {offsets = [0, 0], sizes = [32, 1], strides = [1, 1]} : vector<32x8xf32> to vector<32x1xf32>
      %22 = vector.extract_strided_slice %20 {offsets = [0, 1], sizes = [32, 1], strides = [1, 1]} : vector<32x8xf32> to vector<32x1xf32>
      %23 = vector.extract_strided_slice %20 {offsets = [0, 2], sizes = [32, 1], strides = [1, 1]} : vector<32x8xf32> to vector<32x1xf32>
      %cst = arith.constant dense<0.000000e+00> : vector<32xf32>
      %24 = vector.multi_reduction <add>, %18, %cst [1] : vector<32x16xf32> to vector<32xf32>
      %25 = vector.shape_cast %24 : vector<32xf32> to vector<32x1xf32>
      %26 = arith.mulf %18, %18 : vector<32x16xf32>
      %cst_12 = arith.constant dense<0.000000e+00> : vector<32xf32>
      %27 = vector.multi_reduction <add>, %26, %cst_12 [1] : vector<32x16xf32> to vector<32xf32>
      %28 = vector.shape_cast %27 : vector<32xf32> to vector<32x1xf32>
      %cst_13 = arith.constant 6.250000e-02 : f32
      %29 = vector.broadcast %cst_13 : f32 to vector<32x1xf32>
      %30 = arith.mulf %25, %29 : vector<32x1xf32>
      %cst_14 = arith.constant 6.250000e-02 : f32
      %31 = vector.broadcast %cst_14 : f32 to vector<32x1xf32>
      %32 = arith.mulf %28, %31 : vector<32x1xf32>
      %33 = arith.mulf %30, %30 : vector<32x1xf32>
      %34 = arith.subf %32, %33 : vector<32x1xf32>
      %cst_15 = arith.constant 0.000000e+00 : f32
      %35 = vector.broadcast %cst_15 : f32 to vector<32x1xf32>
      %36 = arith.maximumf %34, %35 : vector<32x1xf32>
      %37 = vector.broadcast %30 : vector<32x1xf32> to vector<32x16xf32>
      %38 = arith.subf %18, %37 : vector<32x16xf32>
      %cst_16 = arith.constant dense<0.000000e+00> : vector<32xf32>
      %39 = vector.multi_reduction <add>, %38, %cst_16 [1] : vector<32x16xf32> to vector<32xf32>
      %40 = vector.shape_cast %39 : vector<32xf32> to vector<32x1xf32>
      %cst_17 = arith.constant 6.250000e-02 : f32
      %41 = vector.broadcast %cst_17 : f32 to vector<32x1xf32>
      %42 = arith.mulf %40, %41 : vector<32x1xf32>
      %43 = arith.mulf %21, %42 : vector<32x1xf32>
      %cst_18 = arith.constant 9.99999974E-6 : f32
      %44 = vector.broadcast %cst_18 : f32 to vector<32x1xf32>
      %45 = arith.addf %36, %44 : vector<32x1xf32>
      %46 = math.rsqrt %45 : vector<32x1xf32>
      %47 = arith.mulf %43, %46 : vector<32x1xf32>
      %cst_19 = arith.constant dense<0.000000e+00> : vector<32xf32>
      %48 = vector.multi_reduction <add>, %19, %cst_19 [1] : vector<32x16xf32> to vector<32xf32>
      %49 = vector.shape_cast %48 : vector<32xf32> to vector<32x1xf32>
      %50 = arith.mulf %19, %19 : vector<32x16xf32>
      %cst_20 = arith.constant dense<0.000000e+00> : vector<32xf32>
      %51 = vector.multi_reduction <add>, %50, %cst_20 [1] : vector<32x16xf32> to vector<32xf32>
      %52 = vector.shape_cast %51 : vector<32xf32> to vector<32x1xf32>
      %cst_21 = arith.constant 6.250000e-02 : f32
      %53 = vector.broadcast %cst_21 : f32 to vector<32x1xf32>
      %54 = arith.mulf %49, %53 : vector<32x1xf32>
      %cst_22 = arith.constant 6.250000e-02 : f32
      %55 = vector.broadcast %cst_22 : f32 to vector<32x1xf32>
      %56 = arith.mulf %52, %55 : vector<32x1xf32>
      %57 = arith.mulf %54, %54 : vector<32x1xf32>
      %58 = arith.subf %56, %57 : vector<32x1xf32>
      %cst_23 = arith.constant 0.000000e+00 : f32
      %59 = vector.broadcast %cst_23 : f32 to vector<32x1xf32>
      %60 = arith.maximumf %58, %59 : vector<32x1xf32>
      %61 = vector.broadcast %54 : vector<32x1xf32> to vector<32x16xf32>
      %62 = arith.subf %19, %61 : vector<32x16xf32>
      %cst_24 = arith.constant dense<0.000000e+00> : vector<32xf32>
      %63 = vector.multi_reduction <add>, %62, %cst_24 [1] : vector<32x16xf32> to vector<32xf32>
      %64 = vector.shape_cast %63 : vector<32xf32> to vector<32x1xf32>
      %cst_25 = arith.constant 6.250000e-02 : f32
      %65 = vector.broadcast %cst_25 : f32 to vector<32x1xf32>
      %66 = arith.mulf %64, %65 : vector<32x1xf32>
      %67 = arith.mulf %22, %66 : vector<32x1xf32>
      %cst_26 = arith.constant 9.99999974E-6 : f32
      %68 = vector.broadcast %cst_26 : f32 to vector<32x1xf32>
      %69 = arith.addf %60, %68 : vector<32x1xf32>
      %70 = math.rsqrt %69 : vector<32x1xf32>
      %71 = arith.mulf %67, %70 : vector<32x1xf32>
      %72 = arith.subf %47, %71 : vector<32x1xf32>
      %73 = arith.addf %72, %23 : vector<32x1xf32>
      %c0_27 = arith.constant 0 : index
      %c0_28 = arith.constant 0 : index
      %74 = vector.load %arg10[%c0_27, %c0_28] : memref<1x1xf32, #tpu.memory_space<vmem>>, vector<1x1xf32>
      %75 = math.absf %73 : vector<32x1xf32>
      %76 = vector.shape_cast %75 : vector<32x1xf32> to vector<1x32x1xf32>
      %cst_29 = arith.constant dense<0.000000e+00> : vector<1xf32>
      %77 = vector.multi_reduction <add>, %76, %cst_29 [1, 2] : vector<1x32x1xf32> to vector<1xf32>
      %78 = vector.shape_cast %77 : vector<1xf32> to vector<1x1x1xf32>
      %79 = vector.extract %78[0, 0, 0] : f32 from vector<1x1x1xf32>
      %80 = vector.broadcast %79 : f32 to vector<1x1xf32>
      %cst_30 = arith.constant 3.125000e-02 : f32
      %81 = vector.broadcast %cst_30 : f32 to vector<1x1xf32>
      %82 = arith.mulf %81, %80 : vector<1x1xf32>
      %83 = arith.addf %74, %82 : vector<1x1xf32>
      %c0_31 = arith.constant 0 : index
      %c0_32 = arith.constant 0 : index
      %84 = vector.load %arg10[%c0_31, %c0_32] : memref<1x1xf32, #tpu.memory_space<vmem>>, vector<1x1xf32>
      tpu.vector_store %arg10[%c0_31, %c0_32], %83 {strides = array<i32>} : memref<1x1xf32, #tpu.memory_space<vmem>>, vector<1x1xf32>,
    } else {
    }
    return
  }
  func.func @transform_0(%arg0: i32) -> (i32, i32) {
    %c0_i32 = arith.constant 0 : i32
    %0 = arith.subi %arg0, %c0_i32 : i32
    %c0_i32_0 = arith.constant 0 : i32
    %c0_i32_1 = arith.constant 0 : i32
    %1 = arith.maxsi %c0_i32_0, %0 : i32
    %2 = arith.minsi %c0_i32_1, %1 : i32
    %c0_i32_2 = arith.constant 0 : i32
    %c0_i32_3 = arith.constant 0 : i32
    return %2, %c0_i32_2 : i32, i32
  }
  func.func @transform_1(%arg0: i32) -> (i32, i32) {
    %c0_i32 = arith.constant 0 : i32
    %0 = arith.subi %arg0, %c0_i32 : i32
    %c0_i32_0 = arith.constant 0 : i32
    %c0_i32_1 = arith.constant 0 : i32
    %1 = arith.maxsi %c0_i32_0, %0 : i32
    %2 = arith.minsi %c0_i32_1, %1 : i32
    %c0_i32_2 = arith.constant 0 : i32
    %c0_i32_3 = arith.constant 0 : i32
    return %2, %c0_i32_2 : i32, i32
  }
  func.func @transform_2(%arg0: i32) -> (i32, i32) {
    %c0_i32 = arith.constant 0 : i32
    %0 = arith.subi %arg0, %c0_i32 : i32
    %c0_i32_0 = arith.constant 0 : i32
    %c0_i32_1 = arith.constant 0 : i32
    %1 = arith.maxsi %c0_i32_0, %0 : i32
    %2 = arith.minsi %c0_i32_1, %1 : i32
    %c0_i32_2 = arith.constant 0 : i32
    %c0_i32_3 = arith.constant 0 : i32
    return %2, %c0_i32_2 : i32, i32
  }
  func.func @transform_3(%arg0: i32) -> (i32, i32) {
    %c1_i32 = arith.constant 1 : i32
    %0 = arith.subi %arg0, %c1_i32 : i32
    %c0_i32 = arith.constant 0 : i32
    %c0_i32_0 = arith.constant 0 : i32
    %1 = arith.maxsi %c0_i32, %0 : i32
    %2 = arith.minsi %c0_i32_0, %1 : i32
    %c0_i32_1 = arith.constant 0 : i32
    %c0_i32_2 = arith.constant 0 : i32
    return %2, %c0_i32_1 : i32, i32
  }
  func.func @transform_4(%arg0: i32) -> (i32, i32) {
    %c1_i32 = arith.constant 1 : i32
    %0 = arith.subi %arg0, %c1_i32 : i32
    %c0_i32 = arith.constant 0 : i32
    %c0_i32_0 = arith.constant 0 : i32
    %1 = arith.maxsi %c0_i32, %0 : i32
    %2 = arith.minsi %c0_i32_0, %1 : i32
    %c0_i32_1 = arith.constant 0 : i32
    %c0_i32_2 = arith.constant 0 : i32
    return %2, %c0_i32_1 : i32, i32
  }
  func.func @transform_5(%arg0: i32) -> (i32, i32) {
    %c1_i32 = arith.constant 1 : i32
    %0 = arith.subi %arg0, %c1_i32 : i32
    %c0_i32 = arith.constant 0 : i32
    %c0_i32_0 = arith.constant 0 : i32
    %1 = arith.maxsi %c0_i32, %0 : i32
    %2 = arith.minsi %c0_i32_0, %1 : i32
    %c0_i32_1 = arith.constant 0 : i32
    %c0_i32_2 = arith.constant 0 : i32
    return %2, %c0_i32_1 : i32, i32
  }
  func.func @transform_6(%arg0: i32) -> (i32, i32) {
    %c2_i32 = arith.constant 2 : i32
    %0 = arith.subi %arg0, %c2_i32 : i32
    %c0_i32 = arith.constant 0 : i32
    %c0_i32_0 = arith.constant 0 : i32
    %1 = arith.maxsi %c0_i32, %0 : i32
    %2 = arith.minsi %c0_i32_0, %1 : i32
    %c0_i32_1 = arith.constant 0 : i32
    %c0_i32_2 = arith.constant 0 : i32
    return %2, %c0_i32_1 : i32, i32
  }
  func.func @transform_7(%arg0: i32) -> (i32, i32) {
    %c2_i32 = arith.constant 2 : i32
    %0 = arith.subi %arg0, %c2_i32 : i32
    %c0_i32 = arith.constant 0 : i32
    %c0_i32_0 = arith.constant 0 : i32
    %1 = arith.maxsi %c0_i32, %0 : i32
    %2 = arith.minsi %c0_i32_0, %1 : i32
    %c0_i32_1 = arith.constant 0 : i32
    %c0_i32_2 = arith.constant 0 : i32
    return %2, %c0_i32_1 : i32, i32
  }
  func.func @transform_8(%arg0: i32) -> (i32, i32) {
    %c2_i32 = arith.constant 2 : i32
    %0 = arith.subi %arg0, %c2_i32 : i32
    %c0_i32 = arith.constant 0 : i32
    %c0_i32_0 = arith.constant 0 : i32
    %1 = arith.maxsi %c0_i32, %0 : i32
    %2 = arith.minsi %c0_i32_0, %1 : i32
    %c0_i32_1 = arith.constant 0 : i32
    %c0_i32_2 = arith.constant 0 : i32
    return %2, %c0_i32_1 : i32, i32
  }
  func.func @transform_9(%arg0: i32) -> (i32, i32) {
    %c0_i32 = arith.constant 0 : i32
    %c0_i32_0 = arith.constant 0 : i32
    %c0_i32_1 = arith.constant 0 : i32
    return %c0_i32, %c0_i32_0 : i32, i32
  }
}

</mosaic_0001>

<llo_original>
// kernel: tpu_custom_call.1
$region0: #{tpu_custom_call.1}
  #allocation0 [shape = 'u32[]', space=smem, size = 0x4, offset = 0x4, fixed_abs, tag = 'smem constant byte address 0x4 - core index']
  #allocation1 [shape = 'u32[144,128]{1,0:T(1,128)}', space=vmem, size = 0x12000, scoped, tag = 'internal scratch']
  %s0 = inlined_call_operand.vmem [shape: f32[8,256], index: 0, kind: input, shape index: {}]
  %s1 = inlined_call_operand.vmem [shape: f32[8,256], index: 1, kind: input, shape index: {}]
  %s2 = inlined_call_operand.vmem [shape: f32[8,8], index: 2, kind: input, shape index: {}]
  %s3 = inlined_call_operand.vmem [shape: f32[16,64], index: 3, kind: input, shape index: {}]
  %s4 = inlined_call_operand.vmem [shape: f32[16,64], index: 4, kind: input, shape index: {}]
  %s5 = inlined_call_operand.vmem [shape: f32[16,8], index: 5, kind: input, shape index: {}]
  %s6 = inlined_call_operand.vmem [shape: f32[32,16], index: 6, kind: input, shape index: {}]
  %s7 = inlined_call_operand.vmem [shape: f32[32,16], index: 7, kind: input, shape index: {}]
  %s8 = inlined_call_operand.vmem [shape: f32[32,8], index: 8, kind: input, shape index: {}]
  %s9 = inlined_call_operand.hbm [shape: f32[1,1], index: 9, kind: output, shape index: {}]
  %s10 = sld [smem:[#allocation0]]
  $region85: #{tpu_custom_call.1} parent=0
    _
  %s12 = ssub.s32 1, %s10
  %s13 = scalar_select 0, %s12, %s10
  $region1: #{tpu_custom_call.1} parent=0
    #allocation2 [shape = 'u8[512]{0}', space=vmem, size = 0x400, scoped, tag = 'output window, operand 0, single buffered']
    #allocation3 [shape = 's32[2]{0}', space=sflag, size = 0x8, scoped, tag = 'scoped memory for tpu_custom_call.1']
    %14 = vsyncpa [#allocation3], 0
    loop: start=0, step=1, limit=5
    $region2: #{tpu_custom_call.1} parent=1 // loop_pre_header
      _
    $region3: #{tpu_custom_call.1} parent=1 // loop_header
      %s16 = sphi 0, %s20
      %p17 = scmp.ge.s32.totalorder %s16, 5
      %s34 = sphi 0, %s36
      %s37 = sphi 0, %s34
      %s38 = sphi 0, %s37
      %s54 = sphi 0, %s38
      %s68 = sphi 0, %s70
      %s71 = sphi 0, %s68
      %s72 = sphi 0, %s71
      %s88 = sphi 0, %s72
      %s102 = sphi 0, %s104
      %s105 = sphi 0, %s102
      %s106 = sphi 0, %s105
      %s122 = sphi 0, %s106
      %s138 = sphi 0, %s140
      %s141 = sphi 0, %s138
      %s142 = sphi 0, %s141
      %s158 = sphi 0, %s142
      %s174 = sphi 0, %s176
      %s177 = sphi 0, %s174
      %s178 = sphi 0, %s177
      %s194 = sphi 0, %s178
      %s210 = sphi 0, %s212
      %s213 = sphi 0, %s210
      %s214 = sphi 0, %s213
      %s230 = sphi 0, %s214
      %s246 = sphi 0, %s248
      %s249 = sphi 0, %s246
      %s250 = sphi 0, %s249
      %s266 = sphi 0, %s250
      %s282 = sphi 0, %s284
      %s285 = sphi 0, %s282
      %s286 = sphi 0, %s285
      %s302 = sphi 0, %s286
      %s318 = sphi 0, %s320
      %s321 = sphi 0, %s318
      %s322 = sphi 0, %s321
      %s338 = sphi 0, %s322
      %s342 = sphi 0, %s342
      %s344 = sphi 0, %s342
      %s345 = sphi 0, %s344
      %s359 = sphi 0, %s345
    $region4: #{tpu_custom_call.1} parent=1 // loop_header_branch
      %19 = sbr.rel (%p17) target = $region8
    $region5: #{tpu_custom_call.1} parent=1 // loop_body
      %s21 = ssub.s32 %s16, 1
      %s22 = ssub.s32 %s16, 2
      %s23 = sadd.s32 %s16, 1
      %p24 = scmp.gt.s32.totalorder %s16, 0
      %s25 = scalar_select %p24, %s16, 0
      %p26 = scmp.lt.s32.totalorder %s25, 0
      %s27 = scalar_select %p26, %s25, 0
      %p28 = scmp.gt.s32.totalorder %s23, 0
      %s29 = scalar_select %p28, %s23, 0
      %p30 = scmp.lt.s32.totalorder %s29, 0
      %s31 = scalar_select %p30, %s29, 0
      %s32 = ssub.s32 %s27, %s31
      %p33 = scmp.eq.s32.totalorder %s32, 0
      %s35 = sadd.s32 %s34, 1
      %s36 = scalar_select %p33, %s34, %s35
      %p39 = pneg %p33
      %p40 = scmp.eq.s32.totalorder %s16, 2
      %p41 = por %p39, %p40
      %p42 = scmp.ne.s32.totalorder %s34, %s37
      %p43 = scmp.eq.s32.totalorder %s16, 0
      %p44 = por %p42, %p43
      %p45 = scmp.ne.s32.totalorder %s34, %s37
      %p46 = scmp.eq.s32.totalorder %s21, 2
      %p47 = por %p45, %p46
      %p48 = scmp.ne.s32.totalorder %s37, %s38
      %p49 = scmp.eq.s32.totalorder %s21, 0
      %p50 = por %p48, %p49
      %p51 = scmp.ne.s32.totalorder %s37, %s38
      %p52 = scmp.eq.s32.totalorder %s22, 2
      %p53 = por %p51, %p52
      %p55 = scmp.ne.s32.totalorder %s38, %s54
      %p56 = scmp.eq.s32.totalorder %s22, 0
      %p57 = por %p55, %p56
      %p58 = scmp.gt.s32.totalorder %s16, 0
      %s59 = scalar_select %p58, %s16, 0
      %p60 = scmp.lt.s32.totalorder %s59, 0
      %s61 = scalar_select %p60, %s59, 0
      %p62 = scmp.gt.s32.totalorder %s23, 0
      %s63 = scalar_select %p62, %s23, 0
      %p64 = scmp.lt.s32.totalorder %s63, 0
      %s65 = scalar_select %p64, %s63, 0
      %s66 = ssub.s32 %s61, %s65
      %p67 = scmp.eq.s32.totalorder %s66, 0
      %s69 = sadd.s32 %s68, 1
      %s70 = scalar_select %p67, %s68, %s69
      %p73 = pneg %p67
      %p74 = scmp.eq.s32.totalorder %s16, 2
      %p75 = por %p73, %p74
      %p76 = scmp.ne.s32.totalorder %s68, %s71
      %p77 = scmp.eq.s32.totalorder %s16, 0
      %p78 = por %p76, %p77
      %p79 = scmp.ne.s32.totalorder %s68, %s71
      %p80 = scmp.eq.s32.totalorder %s21, 2
      %p81 = por %p79, %p80
      %p82 = scmp.ne.s32.totalorder %s71, %s72
      %p83 = scmp.eq.s32.totalorder %s21, 0
      %p84 = por %p82, %p83
      %p85 = scmp.ne.s32.totalorder %s71, %s72
      %p86 = scmp.eq.s32.totalorder %s22, 2
      %p87 = por %p85, %p86
      %p89 = scmp.ne.s32.totalorder %s72, %s88
      %p90 = scmp.eq.s32.totalorder %s22, 0
      %p91 = por %p89, %p90
      %p92 = scmp.gt.s32.totalorder %s16, 0
      %s93 = scalar_select %p92, %s16, 0
      %p94 = scmp.lt.s32.totalorder %s93, 0
      %s95 = scalar_select %p94, %s93, 0
      %p96 = scmp.gt.s32.totalorder %s23, 0
      %s97 = scalar_select %p96, %s23, 0
      %p98 = scmp.lt.s32.totalorder %s97, 0
      %s99 = scalar_select %p98, %s97, 0
      %s100 = ssub.s32 %s95, %s99
      %p101 = scmp.eq.s32.totalorder %s100, 0
      %s103 = sadd.s32 %s102, 1
      %s104 = scalar_select %p101, %s102, %s103
      %p107 = pneg %p101
      %p108 = scmp.eq.s32.totalorder %s16, 2
      %p109 = por %p107, %p108
      %p110 = scmp.ne.s32.totalorder %s102, %s105
      %p111 = scmp.eq.s32.totalorder %s16, 0
      %p112 = por %p110, %p111
      %p113 = scmp.ne.s32.totalorder %s102, %s105
      %p114 = scmp.eq.s32.totalorder %s21, 2
      %p115 = por %p113, %p114
      %p116 = scmp.ne.s32.totalorder %s105, %s106
      %p117 = scmp.eq.s32.totalorder %s21, 0
      %p118 = por %p116, %p117
      %p119 = scmp.ne.s32.totalorder %s105, %s106
      %p120 = scmp.eq.s32.totalorder %s22, 2
      %p121 = por %p119, %p120
      %p123 = scmp.ne.s32.totalorder %s106, %s122
      %p124 = scmp.eq.s32.totalorder %s22, 0
      %p125 = por %p123, %p124
      %s126 = ssub.s32 %s16, 1
      %p127 = scmp.gt.s32.totalorder %s126, 0
      %s128 = scalar_select %p127, %s126, 0
      %p129 = scmp.lt.s32.totalorder %s128, 0
      %s130 = scalar_select %p129, %s128, 0
      %s131 = ssub.s32 %s23, 1
      %p132 = scmp.gt.s32.totalorder %s131, 0
      %s133 = scalar_select %p132, %s131, 0
      %p134 = scmp.lt.s32.totalorder %s133, 0
      %s135 = scalar_select %p134, %s133, 0
      %s136 = ssub.s32 %s130, %s135
      %p137 = scmp.eq.s32.totalorder %s136, 0
      %s139 = sadd.s32 %s138, 1
      %s140 = scalar_select %p137, %s138, %s139
      %p143 = pneg %p137
      %p144 = scmp.eq.s32.totalorder %s16, 2
      %p145 = por %p143, %p144
      %p146 = scmp.ne.s32.totalorder %s138, %s141
      %p147 = scmp.eq.s32.totalorder %s16, 0
      %p148 = por %p146, %p147
      %p149 = scmp.ne.s32.totalorder %s138, %s141
      %p150 = scmp.eq.s32.totalorder %s21, 2
      %p151 = por %p149, %p150
      %p152 = scmp.ne.s32.totalorder %s141, %s142
      %p153 = scmp.eq.s32.totalorder %s21, 0
      %p154 = por %p152, %p153
      %p155 = scmp.ne.s32.totalorder %s141, %s142
      %p156 = scmp.eq.s32.totalorder %s22, 2
      %p157 = por %p155, %p156
      %p159 = scmp.ne.s32.totalorder %s142, %s158
      %p160 = scmp.eq.s32.totalorder %s22, 0
      %p161 = por %p159, %p160
      %s162 = ssub.s32 %s16, 1
      %p163 = scmp.gt.s32.totalorder %s162, 0
      %s164 = scalar_select %p163, %s162, 0
      %p165 = scmp.lt.s32.totalorder %s164, 0
      %s166 = scalar_select %p165, %s164, 0
      %s167 = ssub.s32 %s23, 1
      %p168 = scmp.gt.s32.totalorder %s167, 0
      %s169 = scalar_select %p168, %s167, 0
      %p170 = scmp.lt.s32.totalorder %s169, 0
      %s171 = scalar_select %p170, %s169, 0
      %s172 = ssub.s32 %s166, %s171
      %p173 = scmp.eq.s32.totalorder %s172, 0
      %s175 = sadd.s32 %s174, 1
      %s176 = scalar_select %p173, %s174, %s175
      %p179 = pneg %p173
      %p180 = scmp.eq.s32.totalorder %s16, 2
      %p181 = por %p179, %p180
      %p182 = scmp.ne.s32.totalorder %s174, %s177
      %p183 = scmp.eq.s32.totalorder %s16, 0
      %p184 = por %p182, %p183
      %p185 = scmp.ne.s32.totalorder %s174, %s177
      %p186 = scmp.eq.s32.totalorder %s21, 2
      %p187 = por %p185, %p186
      %p188 = scmp.ne.s32.totalorder %s177, %s178
      %p189 = scmp.eq.s32.totalorder %s21, 0
      %p190 = por %p188, %p189
      %p191 = scmp.ne.s32.totalorder %s177, %s178
      %p192 = scmp.eq.s32.totalorder %s22, 2
      %p193 = por %p191, %p192
      %p195 = scmp.ne.s32.totalorder %s178, %s194
      %p196 = scmp.eq.s32.totalorder %s22, 0
      %p197 = por %p195, %p196
      %s198 = ssub.s32 %s16, 1
      %p199 = scmp.gt.s32.totalorder %s198, 0
      %s200 = scalar_select %p199, %s198, 0
      %p201 = scmp.lt.s32.totalorder %s200, 0
      %s202 = scalar_select %p201, %s200, 0
      %s203 = ssub.s32 %s23, 1
      %p204 = scmp.gt.s32.totalorder %s203, 0
      %s205 = scalar_select %p204, %s203, 0
      %p206 = scmp.lt.s32.totalorder %s205, 0
      %s207 = scalar_select %p206, %s205, 0
      %s208 = ssub.s32 %s202, %s207
      %p209 = scmp.eq.s32.totalorder %s208, 0
      %s211 = sadd.s32 %s210, 1
      %s212 = scalar_select %p209, %s210, %s211
      %p215 = pneg %p209
      %p216 = scmp.eq.s32.totalorder %s16, 2
      %p217 = por %p215, %p216
      %p218 = scmp.ne.s32.totalorder %s210, %s213
      %p219 = scmp.eq.s32.totalorder %s16, 0
      %p220 = por %p218, %p219
      %p221 = scmp.ne.s32.totalorder %s210, %s213
      %p222 = scmp.eq.s32.totalorder %s21, 2
      %p223 = por %p221, %p222
      %p224 = scmp.ne.s32.totalorder %s213, %s214
      %p225 = scmp.eq.s32.totalorder %s21, 0
      %p226 = por %p224, %p225
      %p227 = scmp.ne.s32.totalorder %s213, %s214
      %p228 = scmp.eq.s32.totalorder %s22, 2
      %p229 = por %p227, %p228
      %p231 = scmp.ne.s32.totalorder %s214, %s230
      %p232 = scmp.eq.s32.totalorder %s22, 0
      %p233 = por %p231, %p232
      %s234 = ssub.s32 %s16, 2
      %p235 = scmp.gt.s32.totalorder %s234, 0
      %s236 = scalar_select %p235, %s234, 0
      %p237 = scmp.lt.s32.totalorder %s236, 0
      %s238 = scalar_select %p237, %s236, 0
      %s239 = ssub.s32 %s23, 2
      %p240 = scmp.gt.s32.totalorder %s239, 0
      %s241 = scalar_select %p240, %s239, 0
      %p242 = scmp.lt.s32.totalorder %s241, 0
      %s243 = scalar_select %p242, %s241, 0
      %s244 = ssub.s32 %s238, %s243
      %p245 = scmp.eq.s32.totalorder %s244, 0
      %s247 = sadd.s32 %s246, 1
      %s248 = scalar_select %p245, %s246, %s247
      %p251 = pneg %p245
      %p252 = scmp.eq.s32.totalorder %s16, 2
      %p253 = por %p251, %p252
      %p254 = scmp.ne.s32.totalorder %s246, %s249
      %p255 = scmp.eq.s32.totalorder %s16, 0
      %p256 = por %p254, %p255
      %p257 = scmp.ne.s32.totalorder %s246, %s249
      %p258 = scmp.eq.s32.totalorder %s21, 2
      %p259 = por %p257, %p258
      %p260 = scmp.ne.s32.totalorder %s249, %s250
      %p261 = scmp.eq.s32.totalorder %s21, 0
      %p262 = por %p260, %p261
      %p263 = scmp.ne.s32.totalorder %s249, %s250
      %p264 = scmp.eq.s32.totalorder %s22, 2
      %p265 = por %p263, %p264
      %p267 = scmp.ne.s32.totalorder %s250, %s266
      %p268 = scmp.eq.s32.totalorder %s22, 0
      %p269 = por %p267, %p268
      %s270 = ssub.s32 %s16, 2
      %p271 = scmp.gt.s32.totalorder %s270, 0
      %s272 = scalar_select %p271, %s270, 0
      %p273 = scmp.lt.s32.totalorder %s272, 0
      %s274 = scalar_select %p273, %s272, 0
      %s275 = ssub.s32 %s23, 2
      %p276 = scmp.gt.s32.totalorder %s275, 0
      %s277 = scalar_select %p276, %s275, 0
      %p278 = scmp.lt.s32.totalorder %s277, 0
      %s279 = scalar_select %p278, %s277, 0
      %s280 = ssub.s32 %s274, %s279
      %p281 = scmp.eq.s32.totalorder %s280, 0
      %s283 = sadd.s32 %s282, 1
      %s284 = scalar_select %p281, %s282, %s283
      %p287 = pneg %p281
      %p288 = scmp.eq.s32.totalorder %s16, 2
      %p289 = por %p287, %p288
      %p290 = scmp.ne.s32.totalorder %s282, %s285
      %p291 = scmp.eq.s32.totalorder %s16, 0
      %p292 = por %p290, %p291
      %p293 = scmp.ne.s32.totalorder %s282, %s285
      %p294 = scmp.eq.s32.totalorder %s21, 2
      %p295 = por %p293, %p294
      %p296 = scmp.ne.s32.totalorder %s285, %s286
      %p297 = scmp.eq.s32.totalorder %s21, 0
      %p298 = por %p296, %p297
      %p299 = scmp.ne.s32.totalorder %s285, %s286
      %p300 = scmp.eq.s32.totalorder %s22, 2
      %p301 = por %p299, %p300
      %p303 = scmp.ne.s32.totalorder %s286, %s302
      %p304 = scmp.eq.s32.totalorder %s22, 0
      %p305 = por %p303, %p304
      %s306 = ssub.s32 %s16, 2
      %p307 = scmp.gt.s32.totalorder %s306, 0
      %s308 = scalar_select %p307, %s306, 0
      %p309 = scmp.lt.s32.totalorder %s308, 0
      %s310 = scalar_select %p309, %s308, 0
      %s311 = ssub.s32 %s23, 2
      %p312 = scmp.gt.s32.totalorder %s311, 0
      %s313 = scalar_select %p312, %s311, 0
      %p314 = scmp.lt.s32.totalorder %s313, 0
      %s315 = scalar_select %p314, %s313, 0
      %s316 = ssub.s32 %s310, %s315
      %p317 = scmp.eq.s32.totalorder %s316, 0
      %s319 = sadd.s32 %s318, 1
      %s320 = scalar_select %p317, %s318, %s319
      %p323 = pneg %p317
      %p324 = scmp.eq.s32.totalorder %s16, 2
      %p325 = por %p323, %p324
      %p326 = scmp.ne.s32.totalorder %s318, %s321
      %p327 = scmp.eq.s32.totalorder %s16, 0
      %p328 = por %p326, %p327
      %p329 = scmp.ne.s32.totalorder %s318, %s321
      %p330 = scmp.eq.s32.totalorder %s21, 2
      %p331 = por %p329, %p330
      %p332 = scmp.ne.s32.totalorder %s321, %s322
      %p333 = scmp.eq.s32.totalorder %s21, 0
      %p334 = por %p332, %p333
      %p335 = scmp.ne.s32.totalorder %s321, %s322
      %p336 = scmp.eq.s32.totalorder %s22, 2
      %p337 = por %p335, %p336
      %p339 = scmp.ne.s32.totalorder %s322, %s338
      %p340 = scmp.eq.s32.totalorder %s22, 0
      %p341 = por %p339, %p340
      %s343 = sadd.s32 %s342, 1
      %p346 = scmp.eq.s32.totalorder %s16, 2
      %p347 = scmp.ne.s32.totalorder %s342, %s344
      %p348 = scmp.eq.s32.totalorder %s16, 0
      %p349 = por %p347, %p348
      %p350 = scmp.ne.s32.totalorder %s342, %s344
      %p351 = scmp.eq.s32.totalorder %s21, 2
      %p352 = por %p350, %p351
      %p353 = scmp.ne.s32.totalorder %s344, %s345
      %p354 = scmp.eq.s32.totalorder %s21, 0
      %p355 = por %p353, %p354
      %p356 = scmp.ne.s32.totalorder %s344, %s345
      %p357 = scmp.eq.s32.totalorder %s22, 2
      %p358 = por %p356, %p357
      %p360 = scmp.ne.s32.totalorder %s345, %s359
      %p361 = scmp.eq.s32.totalorder %s22, 0
      %p362 = por %p360, %p361
      %p363 = scmp.le.s32.totalorder 1, %s16
      %p364 = scmp.lt.s32.totalorder %s16, 4
      %p365 = pnand %p363, %p364
      %p366 = pneg %p365
      // Predicated region
      $region9: #{tpu_custom_call.1} parent=5 // pred_check
        _
      $region10: #{tpu_custom_call.1} parent=5 // pred_check_branch
        %368 = sbr.rel (%p365) target = $region12
      $region11: #{tpu_custom_call.1} parent=5 // pred_region
        %s369 = ssub.s32 %s16, 1
      $region12: #{tpu_custom_call.1} parent=5 // pred_fallthru
        _
      %p370 = scmp.lt.s32.totalorder %s16, 3
      // Predicated region
      $region13: #{tpu_custom_call.1} parent=5 // pred_check
        %p371 = pneg %p370
      $region14: #{tpu_custom_call.1} parent=5 // pred_check_branch
        %373 = sbr.rel (%p371) target = $region16
      $region15: #{tpu_custom_call.1} parent=5 // pred_region
        // Predicated region
        $region17: #{tpu_custom_call.1} parent=15 // pred_check
          %p374 = pneg %p44
        $region18: #{tpu_custom_call.1} parent=15 // pred_check_branch
          %376 = sbr.rel (%p374) target = $region20
        $region19: #{tpu_custom_call.1} parent=15 // pred_region
          %p377 = scmp.gt.s32.totalorder %s16, 0
          %s378 = scalar_select %p377, %s16, 0
          %p379 = scmp.lt.s32.totalorder %s378, 0
          %s380 = scalar_select %p379, %s378, 0
          %p381 = scmp.lt.s32.totalorder %s380, 0
          %s382 = scalar_select %p381, %s380, 0
          %s383 = smul.addr %s382, 2
          %s384 = smul.addr %s383, 8
          %s385 = scalar_lea.vmem %s0, %s384
          %p386 = scmp.gt.s32.totalorder %s16, 0
          %s387 = scalar_select %p386, %s16, 0
          %p388 = scmp.lt.s32.totalorder %s387, 0
          %s389 = scalar_select %p388, %s387, 0
        $region20: #{tpu_custom_call.1} parent=15 // pred_fallthru
          _
        // Predicated region
        $region21: #{tpu_custom_call.1} parent=15 // pred_check
          %p390 = pneg %p78
        $region22: #{tpu_custom_call.1} parent=15 // pred_check_branch
          %392 = sbr.rel (%p390) target = $region24
        $region23: #{tpu_custom_call.1} parent=15 // pred_region
          %p393 = scmp.gt.s32.totalorder %s16, 0
          %s394 = scalar_select %p393, %s16, 0
          %p395 = scmp.lt.s32.totalorder %s394, 0
          %s396 = scalar_select %p395, %s394, 0
          %p397 = scmp.lt.s32.totalorder %s396, 0
          %s398 = scalar_select %p397, %s396, 0
          %s399 = smul.addr %s398, 2
          %s400 = smul.addr %s399, 8
          %s401 = scalar_lea.vmem %s1, %s400
          %p402 = scmp.gt.s32.totalorder %s16, 0
          %s403 = scalar_select %p402, %s16, 0
          %p404 = scmp.lt.s32.totalorder %s403, 0
          %s405 = scalar_select %p404, %s403, 0
        $region24: #{tpu_custom_call.1} parent=15 // pred_fallthru
          _
        // Predicated region
        $region25: #{tpu_custom_call.1} parent=15 // pred_check
          %p406 = pneg %p112
        $region26: #{tpu_custom_call.1} parent=15 // pred_check_branch
          %408 = sbr.rel (%p406) target = $region28
        $region27: #{tpu_custom_call.1} parent=15 // pred_region
          %p409 = scmp.gt.s32.totalorder %s16, 0
          %s410 = scalar_select %p409, %s16, 0
          %p411 = scmp.lt.s32.totalorder %s410, 0
          %s412 = scalar_select %p411, %s410, 0
          %p413 = scmp.lt.s32.totalorder %s412, 0
          %s414 = scalar_select %p413, %s412, 0
          %s415 = smul.addr %s414, 8
          %s416 = scalar_lea.vmem %s2, %s415
          %p417 = scmp.gt.s32.totalorder %s16, 0
          %s418 = scalar_select %p417, %s16, 0
          %p419 = scmp.lt.s32.totalorder %s418, 0
          %s420 = scalar_select %p419, %s418, 0
        $region28: #{tpu_custom_call.1} parent=15 // pred_fallthru
          _
        // Predicated region
        $region29: #{tpu_custom_call.1} parent=15 // pred_check
          %p421 = pneg %p148
        $region30: #{tpu_custom_call.1} parent=15 // pred_check_branch
          %423 = sbr.rel (%p421) target = $region32
        $region31: #{tpu_custom_call.1} parent=15 // pred_region
          %s424 = ssub.s32 %s16, 1
          %p425 = scmp.gt.s32.totalorder %s424, 0
          %s426 = scalar_select %p425, %s424, 0
          %p427 = scmp.lt.s32.totalorder %s426, 0
          %s428 = scalar_select %p427, %s426, 0
          %s429 = smul.u32 2, %s428
          %p430 = scmp.lt.s32.totalorder %s429, 1
          %s431 = scalar_select %p430, %s429, 1
          %s432 = smul.addr %s431, 8
          %s433 = scalar_lea.vmem %s3, %s432
          %s434 = ssub.s32 %s16, 1
          %p435 = scmp.gt.s32.totalorder %s434, 0
          %s436 = scalar_select %p435, %s434, 0
          %p437 = scmp.lt.s32.totalorder %s436, 0
          %s438 = scalar_select %p437, %s436, 0
          %s439 = smul.u32 2, %s438
        $region32: #{tpu_custom_call.1} parent=15 // pred_fallthru
          _
        // Predicated region
        $region33: #{tpu_custom_call.1} parent=15 // pred_check
          %p440 = pneg %p184
        $region34: #{tpu_custom_call.1} parent=15 // pred_check_branch
          %442 = sbr.rel (%p440) target = $region36
        $region35: #{tpu_custom_call.1} parent=15 // pred_region
          %s443 = ssub.s32 %s16, 1
          %p444 = scmp.gt.s32.totalorder %s443, 0
          %s445 = scalar_select %p444, %s443, 0
          %p446 = scmp.lt.s32.totalorder %s445, 0
          %s447 = scalar_select %p446, %s445, 0
          %s448 = smul.u32 2, %s447
          %p449 = scmp.lt.s32.totalorder %s448, 1
          %s450 = scalar_select %p449, %s448, 1
          %s451 = smul.addr %s450, 8
          %s452 = scalar_lea.vmem %s4, %s451
          %s453 = ssub.s32 %s16, 1
          %p454 = scmp.gt.s32.totalorder %s453, 0
          %s455 = scalar_select %p454, %s453, 0
          %p456 = scmp.lt.s32.totalorder %s455, 0
          %s457 = scalar_select %p456, %s455, 0
          %s458 = smul.u32 2, %s457
        $region36: #{tpu_custom_call.1} parent=15 // pred_fallthru
          _
        // Predicated region
        $region37: #{tpu_custom_call.1} parent=15 // pred_check
          %p459 = pneg %p220
        $region38: #{tpu_custom_call.1} parent=15 // pred_check_branch
          %461 = sbr.rel (%p459) target = $region40
        $region39: #{tpu_custom_call.1} parent=15 // pred_region
          %s462 = ssub.s32 %s16, 1
          %p463 = scmp.gt.s32.totalorder %s462, 0
          %s464 = scalar_select %p463, %s462, 0
          %p465 = scmp.lt.s32.totalorder %s464, 0
          %s466 = scalar_select %p465, %s464, 0
          %s467 = smul.u32 2, %s466
          %p468 = scmp.lt.s32.totalorder %s467, 1
          %s469 = scalar_select %p468, %s467, 1
          %s470 = smul.addr %s469, 8
          %s471 = scalar_lea.vmem %s5, %s470
          %s472 = ssub.s32 %s16, 1
          %p473 = scmp.gt.s32.totalorder %s472, 0
          %s474 = scalar_select %p473, %s472, 0
          %p475 = scmp.lt.s32.totalorder %s474, 0
          %s476 = scalar_select %p475, %s474, 0
          %s477 = smul.u32 2, %s476
        $region40: #{tpu_custom_call.1} parent=15 // pred_fallthru
          _
        // Predicated region
        $region41: #{tpu_custom_call.1} parent=15 // pred_check
          %p478 = pneg %p256
        $region42: #{tpu_custom_call.1} parent=15 // pred_check_branch
          %480 = sbr.rel (%p478) target = $region44
        $region43: #{tpu_custom_call.1} parent=15 // pred_region
          %s481 = ssub.s32 %s16, 2
          %p482 = scmp.gt.s32.totalorder %s481, 0
          %s483 = scalar_select %p482, %s481, 0
          %p484 = scmp.lt.s32.totalorder %s483, 0
          %s485 = scalar_select %p484, %s483, 0
          %s486 = smul.u32 4, %s485
          %p487 = scmp.lt.s32.totalorder %s486, 3
          %s488 = scalar_select %p487, %s486, 3
          %s489 = smul.addr %s488, 8
          %s490 = scalar_lea.vmem %s6, %s489
          %s491 = ssub.s32 %s16, 2
          %p492 = scmp.gt.s32.totalorder %s491, 0
          %s493 = scalar_select %p492, %s491, 0
          %p494 = scmp.lt.s32.totalorder %s493, 0
          %s495 = scalar_select %p494, %s493, 0
          %s496 = smul.u32 4, %s495
        $region44: #{tpu_custom_call.1} parent=15 // pred_fallthru
          _
        // Predicated region
        $region45: #{tpu_custom_call.1} parent=15 // pred_check
          %p497 = pneg %p292
        $region46: #{tpu_custom_call.1} parent=15 // pred_check_branch
          %499 = sbr.rel (%p497) target = $region48
        $region47: #{tpu_custom_call.1} parent=15 // pred_region
          %s500 = ssub.s32 %s16, 2
          %p501 = scmp.gt.s32.totalorder %s500, 0
          %s502 = scalar_select %p501, %s500, 0
          %p503 = scmp.lt.s32.totalorder %s502, 0
          %s504 = scalar_select %p503, %s502, 0
          %s505 = smul.u32 4, %s504
          %p506 = scmp.lt.s32.totalorder %s505, 3
          %s507 = scalar_select %p506, %s505, 3
          %s508 = smul.addr %s507, 8
          %s509 = scalar_lea.vmem %s7, %s508
          %s510 = ssub.s32 %s16, 2
          %p511 = scmp.gt.s32.totalorder %s510, 0
          %s512 = scalar_select %p511, %s510, 0
          %p513 = scmp.lt.s32.totalorder %s512, 0
          %s514 = scalar_select %p513, %s512, 0
          %s515 = smul.u32 4, %s514
        $region48: #{tpu_custom_call.1} parent=15 // pred_fallthru
          _
        // Predicated region
        $region49: #{tpu_custom_call.1} parent=15 // pred_check
          %p516 = pneg %p328
        $region50: #{tpu_custom_call.1} parent=15 // pred_check_branch
          %518 = sbr.rel (%p516) target = $region52
        $region51: #{tpu_custom_call.1} parent=15 // pred_region
          %s519 = ssub.s32 %s16, 2
          %p520 = scmp.gt.s32.totalorder %s519, 0
          %s521 = scalar_select %p520, %s519, 0
          %p522 = scmp.lt.s32.totalorder %s521, 0
          %s523 = scalar_select %p522, %s521, 0
          %s524 = smul.u32 4, %s523
          %p525 = scmp.lt.s32.totalorder %s524, 3
          %s526 = scalar_select %p525, %s524, 3
          %s527 = smul.addr %s526, 8
          %s528 = scalar_lea.vmem %s8, %s527
          %s529 = ssub.s32 %s16, 2
          %p530 = scmp.gt.s32.totalorder %s529, 0
          %s531 = scalar_select %p530, %s529, 0
          %p532 = scmp.lt.s32.totalorder %s531, 0
          %s533 = scalar_select %p532, %s531, 0
          %s534 = smul.u32 4, %s533
        $region52: #{tpu_custom_call.1} parent=15 // pred_fallthru
          _
      $region16: #{tpu_custom_call.1} parent=5 // pred_fallthru
        _
      %p535 = scmp.le.s32.totalorder 1, %s16
      %p536 = scmp.lt.s32.totalorder %s16, 4
      %p537 = pnand %p535, %p536
      %p538 = pneg %p537
      // Predicated region
      $region53: #{tpu_custom_call.1} parent=5 // pred_check
        _
      $region54: #{tpu_custom_call.1} parent=5 // pred_check_branch
        %540 = sbr.rel (%p537) target = $region56
      $region55: #{tpu_custom_call.1} parent=5 // pred_region
        %s541 = ssub.s32 %s16, 1
        %p542 = scmp.gt.s32.totalorder %s21, 0
        %s543 = scalar_select %p542, %s21, 0
        %p544 = scmp.lt.s32.totalorder %s543, 0
        %s545 = scalar_select %p544, %s543, 0
        %p546 = scmp.lt.s32.totalorder %s545, 0
        %s547 = scalar_select %p546, %s545, 0
        %s548 = smul.addr %s547, 2
        %s549 = smul.addr %s548, 8
        %s550 = scalar_lea.vmem %s0, %s549
        %p551 = pneg %p50
        %p552 = pneg %p47
        %p553 = scmp.gt.s32.totalorder %s21, 0
        %s554 = scalar_select %p553, %s21, 0
        %p555 = scmp.lt.s32.totalorder %s554, 0
        %s556 = scalar_select %p555, %s554, 0
        %p557 = scmp.lt.s32.totalorder %s556, 0
        %s558 = scalar_select %p557, %s556, 0
        %s559 = smul.addr %s558, 2
        %s560 = smul.addr %s559, 8
        %s561 = scalar_lea.vmem %s1, %s560
        %p562 = pneg %p84
        %p563 = pneg %p81
        %p564 = scmp.gt.s32.totalorder %s21, 0
        %s565 = scalar_select %p564, %s21, 0
        %p566 = scmp.lt.s32.totalorder %s565, 0
        %s567 = scalar_select %p566, %s565, 0
        %p568 = scmp.lt.s32.totalorder %s567, 0
        %s569 = scalar_select %p568, %s567, 0
        %s570 = smul.addr %s569, 8
        %s571 = scalar_lea.vmem %s2, %s570
        %p572 = pneg %p118
        %p573 = pneg %p115
        %s574 = ssub.s32 %s21, 1
        %p575 = scmp.gt.s32.totalorder %s574, 0
        %s576 = scalar_select %p575, %s574, 0
        %p577 = scmp.lt.s32.totalorder %s576, 0
        %s578 = scalar_select %p577, %s576, 0
        %s579 = smul.u32 2, %s578
        %p580 = scmp.lt.s32.totalorder %s579, 1
        %s581 = scalar_select %p580, %s579, 1
        %s582 = smul.addr %s581, 8
        %s583 = scalar_lea.vmem %s3, %s582
        %p584 = pneg %p154
        %p585 = pneg %p151
        %s586 = ssub.s32 %s21, 1
        %p587 = scmp.gt.s32.totalorder %s586, 0
        %s588 = scalar_select %p587, %s586, 0
        %p589 = scmp.lt.s32.totalorder %s588, 0
        %s590 = scalar_select %p589, %s588, 0
        %s591 = smul.u32 2, %s590
        %p592 = scmp.lt.s32.totalorder %s591, 1
        %s593 = scalar_select %p592, %s591, 1
        %s594 = smul.addr %s593, 8
        %s595 = scalar_lea.vmem %s4, %s594
        %p596 = pneg %p190
        %p597 = pneg %p187
        %s598 = ssub.s32 %s21, 1
        %p599 = scmp.gt.s32.totalorder %s598, 0
        %s600 = scalar_select %p599, %s598, 0
        %p601 = scmp.lt.s32.totalorder %s600, 0
        %s602 = scalar_select %p601, %s600, 0
        %s603 = smul.u32 2, %s602
        %p604 = scmp.lt.s32.totalorder %s603, 1
        %s605 = scalar_select %p604, %s603, 1
        %s606 = smul.addr %s605, 8
        %s607 = scalar_lea.vmem %s5, %s606
        %p608 = pneg %p226
        %p609 = pneg %p223
        %s610 = ssub.s32 %s21, 2
        %p611 = scmp.gt.s32.totalorder %s610, 0
        %s612 = scalar_select %p611, %s610, 0
        %p613 = scmp.lt.s32.totalorder %s612, 0
        %s614 = scalar_select %p613, %s612, 0
        %s615 = smul.u32 4, %s614
        %p616 = scmp.lt.s32.totalorder %s615, 3
        %s617 = scalar_select %p616, %s615, 3
        %s618 = smul.addr %s617, 8
        %s619 = scalar_lea.vmem %s6, %s618
        %p620 = pneg %p262
        %p621 = pneg %p259
        %s622 = ssub.s32 %s21, 2
        %p623 = scmp.gt.s32.totalorder %s622, 0
        %s624 = scalar_select %p623, %s622, 0
        %p625 = scmp.lt.s32.totalorder %s624, 0
        %s626 = scalar_select %p625, %s624, 0
        %s627 = smul.u32 4, %s626
        %p628 = scmp.lt.s32.totalorder %s627, 3
        %s629 = scalar_select %p628, %s627, 3
        %s630 = smul.addr %s629, 8
        %s631 = scalar_lea.vmem %s7, %s630
        %p632 = pneg %p298
        %p633 = pneg %p295
        %s634 = ssub.s32 %s21, 2
        %p635 = scmp.gt.s32.totalorder %s634, 0
        %s636 = scalar_select %p635, %s634, 0
        %p637 = scmp.lt.s32.totalorder %s636, 0
        %s638 = scalar_select %p637, %s636, 0
        %s639 = smul.u32 4, %s638
        %p640 = scmp.lt.s32.totalorder %s639, 3
        %s641 = scalar_select %p640, %s639, 3
        %s642 = smul.addr %s641, 8
        %s643 = scalar_lea.vmem %s8, %s642
        %p644 = pneg %p334
        %p645 = pneg %p331
        %p646 = pneg %p355
        %p647 = pneg %p352
        %p648 = scmp.gt.s32.totalorder %s21, 0
        %s649 = scalar_select %p648, %s21, 0
        %p650 = scmp.lt.s32.totalorder %s649, 0
        %s651 = scalar_select %p650, %s649, 0
        %p652 = scmp.lt.s32.totalorder %s651, 0
        %s653 = scalar_select %p652, %s651, 0
        %s654 = smul.addr %s653, 2
        %s655 = smul.addr %s654, 8
        %s656 = scalar_lea.vmem %s0, %s655
        %p657 = scmp.gt.s32.totalorder %s21, 0
        %s658 = scalar_select %p657, %s21, 0
        %p659 = scmp.lt.s32.totalorder %s658, 0
        %s660 = scalar_select %p659, %s658, 0
        %p661 = scmp.gt.s32.totalorder %s21, 0
        %s662 = scalar_select %p661, %s21, 0
        %p663 = scmp.lt.s32.totalorder %s662, 0
        %s664 = scalar_select %p663, %s662, 0
        %p665 = scmp.lt.s32.totalorder %s664, 0
        %s666 = scalar_select %p665, %s664, 0
        %s667 = smul.addr %s666, 2
        %s668 = smul.addr %s667, 8
        %s669 = scalar_lea.vmem %s1, %s668
        %p670 = scmp.gt.s32.totalorder %s21, 0
        %s671 = scalar_select %p670, %s21, 0
        %p672 = scmp.lt.s32.totalorder %s671, 0
        %s673 = scalar_select %p672, %s671, 0
        %p674 = scmp.gt.s32.totalorder %s21, 0
        %s675 = scalar_select %p674, %s21, 0
        %p676 = scmp.lt.s32.totalorder %s675, 0
        %s677 = scalar_select %p676, %s675, 0
        %p678 = scmp.lt.s32.totalorder %s677, 0
        %s679 = scalar_select %p678, %s677, 0
        %s680 = smul.addr %s679, 8
        %s681 = scalar_lea.vmem %s2, %s680
        %p682 = scmp.gt.s32.totalorder %s21, 0
        %s683 = scalar_select %p682, %s21, 0
        %p684 = scmp.lt.s32.totalorder %s683, 0
        %s685 = scalar_select %p684, %s683, 0
        %s686 = ssub.s32 %s21, 1
        %p687 = scmp.gt.s32.totalorder %s686, 0
        %s688 = scalar_select %p687, %s686, 0
        %p689 = scmp.lt.s32.totalorder %s688, 0
        %s690 = scalar_select %p689, %s688, 0
        %s691 = smul.u32 2, %s690
        %p692 = scmp.lt.s32.totalorder %s691, 1
        %s693 = scalar_select %p692, %s691, 1
        %s694 = smul.addr %s693, 8
        %s695 = scalar_lea.vmem %s3, %s694
        %s696 = ssub.s32 %s21, 1
        %p697 = scmp.gt.s32.totalorder %s696, 0
        %s698 = scalar_select %p697, %s696, 0
        %p699 = scmp.lt.s32.totalorder %s698, 0
        %s700 = scalar_select %p699, %s698, 0
        %s701 = smul.u32 2, %s700
        %s702 = ssub.s32 %s21, 1
        %p703 = scmp.gt.s32.totalorder %s702, 0
        %s704 = scalar_select %p703, %s702, 0
        %p705 = scmp.lt.s32.totalorder %s704, 0
        %s706 = scalar_select %p705, %s704, 0
        %s707 = smul.u32 2, %s706
        %p708 = scmp.lt.s32.totalorder %s707, 1
        %s709 = scalar_select %p708, %s707, 1
        %s710 = smul.addr %s709, 8
        %s711 = scalar_lea.vmem %s4, %s710
        %s712 = ssub.s32 %s21, 1
        %p713 = scmp.gt.s32.totalorder %s712, 0
        %s714 = scalar_select %p713, %s712, 0
        %p715 = scmp.lt.s32.totalorder %s714, 0
        %s716 = scalar_select %p715, %s714, 0
        %s717 = smul.u32 2, %s716
        %s718 = ssub.s32 %s21, 1
        %p719 = scmp.gt.s32.totalorder %s718, 0
        %s720 = scalar_select %p719, %s718, 0
        %p721 = scmp.lt.s32.totalorder %s720, 0
        %s722 = scalar_select %p721, %s720, 0
        %s723 = smul.u32 2, %s722
        %p724 = scmp.lt.s32.totalorder %s723, 1
        %s725 = scalar_select %p724, %s723, 1
        %s726 = smul.addr %s725, 8
        %s727 = scalar_lea.vmem %s5, %s726
        %s728 = ssub.s32 %s21, 1
        %p729 = scmp.gt.s32.totalorder %s728, 0
        %s730 = scalar_select %p729, %s728, 0
        %p731 = scmp.lt.s32.totalorder %s730, 0
        %s732 = scalar_select %p731, %s730, 0
        %s733 = smul.u32 2, %s732
        %s734 = ssub.s32 %s21, 2
        %p735 = scmp.gt.s32.totalorder %s734, 0
        %s736 = scalar_select %p735, %s734, 0
        %p737 = scmp.lt.s32.totalorder %s736, 0
        %s738 = scalar_select %p737, %s736, 0
        %s739 = smul.u32 4, %s738
        %p740 = scmp.lt.s32.totalorder %s739, 3
        %s741 = scalar_select %p740, %s739, 3
        %s742 = smul.addr %s741, 8
        %s743 = scalar_lea.vmem %s6, %s742
        %s744 = ssub.s32 %s21, 2
        %p745 = scmp.gt.s32.totalorder %s744, 0
        %s746 = scalar_select %p745, %s744, 0
        %p747 = scmp.lt.s32.totalorder %s746, 0
        %s748 = scalar_select %p747, %s746, 0
        %s749 = smul.u32 4, %s748
        %s750 = ssub.s32 %s21, 2
        %p751 = scmp.gt.s32.totalorder %s750, 0
        %s752 = scalar_select %p751, %s750, 0
        %p753 = scmp.lt.s32.totalorder %s752, 0
        %s754 = scalar_select %p753, %s752, 0
        %s755 = smul.u32 4, %s754
        %p756 = scmp.lt.s32.totalorder %s755, 3
        %s757 = scalar_select %p756, %s755, 3
        %s758 = smul.addr %s757, 8
        %s759 = scalar_lea.vmem %s7, %s758
        %s760 = ssub.s32 %s21, 2
        %p761 = scmp.gt.s32.totalorder %s760, 0
        %s762 = scalar_select %p761, %s760, 0
        %p763 = scmp.lt.s32.totalorder %s762, 0
        %s764 = scalar_select %p763, %s762, 0
        %s765 = smul.u32 4, %s764
        %s766 = ssub.s32 %s21, 2
        %p767 = scmp.gt.s32.totalorder %s766, 0
        %s768 = scalar_select %p767, %s766, 0
        %p769 = scmp.lt.s32.totalorder %s768, 0
        %s770 = scalar_select %p769, %s768, 0
        %s771 = smul.u32 4, %s770
        %p772 = scmp.lt.s32.totalorder %s771, 3
        %s773 = scalar_select %p772, %s771, 3
        %s774 = smul.addr %s773, 8
        %s775 = scalar_lea.vmem %s8, %s774
        %s776 = ssub.s32 %s21, 2
        %p777 = scmp.gt.s32.totalorder %s776, 0
        %s778 = scalar_select %p777, %s776, 0
        %p779 = scmp.lt.s32.totalorder %s778, 0
        %s780 = scalar_select %p779, %s778, 0
        %s781 = smul.u32 4, %s780
        %p782 = scmp.eq.s32.totalorder %s21, 0
        // Predicated region
        $region57: #{tpu_custom_call.1} parent=55 // pred_check
          %p783 = pneg %p782
        $region58: #{tpu_custom_call.1} parent=55 // pred_check_branch
          %785 = sbr.rel (%p783) target = $region60
        $region59: #{tpu_custom_call.1} parent=55 // pred_region
          %vm786 = vcmask 0
          %787 = vst.msk [vmem:[#allocation2] sm:$0x1] %vm786, 0.0
        $region60: #{tpu_custom_call.1} parent=55 // pred_fallthru
          _
        %p788 = scmp.ge.s32.totalorder %s21, 0
        %p789 = scmp.lt.s32.totalorder %s21, 1
        %p790 = pnand %p788, %p789
        %p791 = pneg %p790
        // Predicated region
        $region61: #{tpu_custom_call.1} parent=55 // pred_check
          _
        $region62: #{tpu_custom_call.1} parent=55 // pred_check_branch
          %793 = sbr.rel (%p790) target = $region64
        $region63: #{tpu_custom_call.1} parent=55 // pred_region
          %v794 = vld [vmem:[%s656] sm:$0xff]
          %v795 = vld [vmem:[%s656 + $0x8] sm:$0xff]
          %v796 = vld [vmem:[%s669] sm:$0xff]
          %v797 = vld [vmem:[%s669 + $0x8] sm:$0xff]
          %v798 = vld [vmem:[%s681] sm:$0xff]
          %v799 = vadd.f32 %v794, %v795
          %800 = vadd.xlane.f32.xlu0 %v799
          %v801 = vpop.xlane.xlu0 %800
          %v802 = vmul.f32 %v794, %v794
          %v803 = vmul.f32 %v795, %v795
          %v804 = vadd.f32 %v802, %v803
          %805 = vadd.xlane.f32.xlu0 %v804
          %v806 = vpop.xlane.xlu0 %805
          %v807 = vmul.f32 %v801, 0.00390625
          %v808 = vmul.f32 %v806, 0.00390625
          %v809 = vmul.f32 %v807, %v807
          %v810 = vsub.f32 %v808, %v809
          %v811 = vmax.f32 %v810, 0.0
          %v812 = vsub.f32 %v794, %v807
          %v813 = vsub.f32 %v795, %v807
          %v814 = vadd.f32 %v812, %v813
          %815 = vadd.xlane.f32.xlu0 %v814
          %v816 = vpop.xlane.xlu0 %815
          %v817 = vmul.f32 %v816, 0.00390625
          %v818 = vmul.f32 %v798, %v817
          %v819 = vadd.f32 %v811, 1e-05
          %v820 = vrsqrt.pop %v819
          %v821 = vmul.f32 %v818, %v820
          %v822 = vadd.f32 %v796, %v797
          %823 = vadd.xlane.f32.xlu0 %v822
          %v824 = vpop.xlane.xlu0 %823
          %v825 = vmul.f32 %v796, %v796
          %v826 = vmul.f32 %v797, %v797
          %v827 = vadd.f32 %v825, %v826
          %828 = vadd.xlane.f32.xlu0 %v827
          %v829 = vpop.xlane.xlu0 %828
          %v830 = vmul.f32 %v824, 0.00390625
          %v831 = vmul.f32 %v829, 0.00390625
          %v832 = vmul.f32 %v830, %v830
          %v833 = vsub.f32 %v831, %v832
          %v834 = vmax.f32 %v833, 0.0
          %v835 = vsub.f32 %v796, %v830
          %v836 = vsub.f32 %v797, %v830
          %v837 = vadd.f32 %v835, %v836
          %838 = vadd.xlane.f32.xlu0 %v837
          %v839 = vpop.xlane.xlu0 %838
          %v840 = vmul.f32 %v839, 0.00390625
          %v841 = vmul.f32 %v798, %v840
          %v842 = vadd.f32 %v834, 1e-05
          %v843 = vrsqrt.pop %v842
          %v844 = vmul.f32 %v841, %v843
          %846 = vrot.lane.b32.xlu0 %v844, 127
          %v847 = vpop.permute.xlu0 %846
          %v849 = vsub.f32 %v821, %v847
          %851 = vrot.lane.b32.xlu0 %v798, 126
          %v852 = vpop.permute.xlu0 %851
          %v854 = vadd.f32 %v849, %v852
          %v855 = vld [vmem:[#allocation2] sm:$0x1]
          %v856 = vand.u32 2147483647, %v854
          %vm857 = vcmask 7168
          %v858 = vsel %vm857, %v856, 0.0
          %859 = vadd.xlane.f32.xlu0 %v858
          %v860 = vpop.xlane.xlu0 %859
          %v861 = vrot.slane %v860, 4
          %v862 = vadd.f32 %v860, %v861
          %v863 = vrot.slane %v862, 2
          %v864 = vadd.f32 %v862, %v863
          %v865 = vrot.slane %v864, 1
          %v866 = vadd.f32 %v864, %v865
          %s867 = vtos %v866
          %v868 = vstv %s867
          %v869 = vmul.f32 %v868, 0.125
          %v870 = vadd.f32 %v855, %v869
          %vm871 = vcmask 0
          %872 = vst.msk [vmem:[#allocation2] sm:$0x1] %vm871, %v870
        $region64: #{tpu_custom_call.1} parent=55 // pred_fallthru
          _
        %p873 = scmp.ge.s32.totalorder %s21, 1
        %p874 = scmp.lt.s32.totalorder %s21, 2
        %p875 = pnand %p873, %p874
        %p876 = pneg %p875
        // Predicated region
        $region65: #{tpu_custom_call.1} parent=55 // pred_check
          _
        $region66: #{tpu_custom_call.1} parent=55 // pred_check_branch
          %878 = sbr.rel (%p875) target = $region68
        $region67: #{tpu_custom_call.1} parent=55 // pred_region
          %v879 = vld [vmem:[%s695] sm:$0xff]
          %v880 = vld [vmem:[%s695 + $0x8] sm:$0xff]
          %v881 = vld [vmem:[%s711] sm:$0xff]
          %v882 = vld [vmem:[%s711 + $0x8] sm:$0xff]
          %v883 = vld [vmem:[%s727] sm:$0xff]
          %v884 = vld [vmem:[%s727 + $0x8] sm:$0xff]
          %vm885 = vcmask 523264
          %v886 = vsel %vm885, %v879, 0.0
          %887 = vadd.xlane.f32.xlu0 %v886
          %v888 = vpop.xlane.xlu0 %887
          %v889 = vsel %vm885, %v880, 0.0
          %890 = vadd.xlane.f32.xlu0 %v889
          %v891 = vpop.xlane.xlu0 %890
          %v892 = vmul.f32 %v879, %v879
          %v893 = vmul.f32 %v880, %v880
          %v894 = vsel %vm885, %v892, 0.0
          %895 = vadd.xlane.f32.xlu0 %v894
          %v896 = vpop.xlane.xlu0 %895
          %v897 = vsel %vm885, %v893, 0.0
          %898 = vadd.xlane.f32.xlu0 %v897
          %v899 = vpop.xlane.xlu0 %898
          %v900 = vmul.f32 %v888, 0.015625
          %v901 = vmul.f32 %v891, 0.015625
          %v902 = vmul.f32 %v896, 0.015625
          %v903 = vmul.f32 %v899, 0.015625
          %v904 = vmul.f32 %v900, %v900
          %v905 = vmul.f32 %v901, %v901
          %v906 = vsub.f32 %v902, %v904
          %v907 = vsub.f32 %v903, %v905
          %v908 = vmax.f32 %v906, 0.0
          %v909 = vmax.f32 %v907, 0.0
          %v910 = vsub.f32 %v879, %v900
          %v911 = vsub.f32 %v880, %v901
          %v912 = vsel %vm885, %v910, 0.0
          %913 = vadd.xlane.f32.xlu0 %v912
          %v914 = vpop.xlane.xlu0 %913
          %v915 = vsel %vm885, %v911, 0.0
          %916 = vadd.xlane.f32.xlu0 %v915
          %v917 = vpop.xlane.xlu0 %916
          %v918 = vmul.f32 %v914, 0.015625
          %v919 = vmul.f32 %v917, 0.015625
          %v920 = vmul.f32 %v883, %v918
          %v921 = vmul.f32 %v884, %v919
          %v922 = vadd.f32 %v908, 1e-05
          %v923 = vadd.f32 %v909, 1e-05
          %v924 = vrsqrt.pop %v922
          %v925 = vrsqrt.pop %v923
          %v926 = vmul.f32 %v920, %v924
          %v927 = vmul.f32 %v921, %v925
          %v928 = vsel %vm885, %v881, 0.0
          %929 = vadd.xlane.f32.xlu0 %v928
          %v930 = vpop.xlane.xlu0 %929
          %v931 = vsel %vm885, %v882, 0.0
          %932 = vadd.xlane.f32.xlu0 %v931
          %v933 = vpop.xlane.xlu0 %932
          %v934 = vmul.f32 %v881, %v881
          %v935 = vmul.f32 %v882, %v882
          %v936 = vsel %vm885, %v934, 0.0
          %937 = vadd.xlane.f32.xlu0 %v936
          %v938 = vpop.xlane.xlu0 %937
          %v939 = vsel %vm885, %v935, 0.0
          %940 = vadd.xlane.f32.xlu0 %v939
          %v941 = vpop.xlane.xlu0 %940
          %v942 = vmul.f32 %v930, 0.015625
          %v943 = vmul.f32 %v933, 0.015625
          %v944 = vmul.f32 %v938, 0.015625
          %v945 = vmul.f32 %v941, 0.015625
          %v946 = vmul.f32 %v942, %v942
          %v947 = vmul.f32 %v943, %v943
          %v948 = vsub.f32 %v944, %v946
          %v949 = vsub.f32 %v945, %v947
          %v950 = vmax.f32 %v948, 0.0
          %v951 = vmax.f32 %v949, 0.0
          %v952 = vsub.f32 %v881, %v942
          %v953 = vsub.f32 %v882, %v943
          %v954 = vsel %vm885, %v952, 0.0
          %955 = vadd.xlane.f32.xlu0 %v954
          %v956 = vpop.xlane.xlu0 %955
          %v957 = vsel %vm885, %v953, 0.0
          %958 = vadd.xlane.f32.xlu0 %v957
          %v959 = vpop.xlane.xlu0 %958
          %v960 = vmul.f32 %v956, 0.015625
          %v961 = vmul.f32 %v959, 0.015625
          %v962 = vmul.f32 %v883, %v960
          %v963 = vmul.f32 %v884, %v961
          %v964 = vadd.f32 %v950, 1e-05
          %v965 = vadd.f32 %v951, 1e-05
          %v966 = vrsqrt.pop %v964
          %v967 = vrsqrt.pop %v965
          %v968 = vmul.f32 %v962, %v966
          %v969 = vmul.f32 %v963, %v967
          %972 = vrot.lane.b32.xlu0 %v968, 127
          %v973 = vpop.permute.xlu0 %972
          %974 = vrot.lane.b32.xlu0 %v969, 127
          %v975 = vpop.permute.xlu0 %974
          %v978 = vsub.f32 %v926, %v973
          %v979 = vsub.f32 %v927, %v975
          %982 = vrot.lane.b32.xlu0 %v883, 126
          %v983 = vpop.permute.xlu0 %982
          %984 = vrot.lane.b32.xlu0 %v884, 126
          %v985 = vpop.permute.xlu0 %984
          %v988 = vadd.f32 %v978, %v983
          %v989 = vadd.f32 %v979, %v985
          %v990 = vld [vmem:[#allocation2] sm:$0x1]
          %v991 = vand.u32 2147483647, %v988
          %v992 = vand.u32 2147483647, %v989
          %vm993 = vcmask 7168
          %v994 = vsel %vm993, %v991, 0.0
          %v995 = vsel %vm993, %v992, 0.0
          %v996 = vadd.f32 %v994, %v995
          %997 = vadd.xlane.f32.xlu0 %v996
          %v998 = vpop.xlane.xlu0 %997
          %v999 = vrot.slane %v998, 4
          %v1000 = vadd.f32 %v998, %v999
          %v1001 = vrot.slane %v1000, 2
          %v1002 = vadd.f32 %v1000, %v1001
          %v1003 = vrot.slane %v1002, 1
          %v1004 = vadd.f32 %v1002, %v1003
          %s1005 = vtos %v1004
          %v1006 = vstv %s1005
          %v1007 = vmul.f32 %v1006, 0.0625
          %v1008 = vadd.f32 %v990, %v1007
          %vm1009 = vcmask 0
          %1010 = vst.msk [vmem:[#allocation2] sm:$0x1] %vm1009, %v1008
        $region68: #{tpu_custom_call.1} parent=55 // pred_fallthru
          _
        %p1011 = scmp.ge.s32.totalorder %s21, 2
        %p1012 = scmp.lt.s32.totalorder %s21, 3
        %p1013 = pnand %p1011, %p1012
        %p1014 = pneg %p1013
        // Predicated region
        $region69: #{tpu_custom_call.1} parent=55 // pred_check
          _
        $region70: #{tpu_custom_call.1} parent=55 // pred_check_branch
          %1016 = sbr.rel (%p1013) target = $region72
        $region71: #{tpu_custom_call.1} parent=55 // pred_region
          %v1017 = vld [vmem:[%s743] sm:$0xff]
          %v1018 = vld [vmem:[%s743 + $0x8] sm:$0xff]
          %v1019 = vld [vmem:[%s743 + $0x10] sm:$0xff]
          %v1020 = vld [vmem:[%s743 + $0x18] sm:$0xff]
          %v1021 = vld [vmem:[%s759] sm:$0xff]
          %v1022 = vld [vmem:[%s759 + $0x8] sm:$0xff]
          %v1023 = vld [vmem:[%s759 + $0x10] sm:$0xff]
          %v1024 = vld [vmem:[%s759 + $0x18] sm:$0xff]
          %v1025 = vld [vmem:[%s775] sm:$0xff]
          %v1026 = vld [vmem:[%s775 + $0x8] sm:$0xff]
          %v1027 = vld [vmem:[%s775 + $0x10] sm:$0xff]
          %v1028 = vld [vmem:[%s775 + $0x18] sm:$0xff]
          %vm1029 = vcmask 130048
          %v1030 = vsel %vm1029, %v1017, 0.0
          %1031 = vadd.xlane.f32.xlu0 %v1030
          %v1032 = vpop.xlane.xlu0 %1031
          %v1033 = vsel %vm1029, %v1018, 0.0
          %1034 = vadd.xlane.f32.xlu0 %v1033
          %v1035 = vpop.xlane.xlu0 %1034
          %v1036 = vsel %vm1029, %v1019, 0.0
          %1037 = vadd.xlane.f32.xlu0 %v1036
          %v1038 = vpop.xlane.xlu0 %1037
          %v1039 = vsel %vm1029, %v1020, 0.0
          %1040 = vadd.xlane.f32.xlu0 %v1039
          %v1041 = vpop.xlane.xlu0 %1040
          %v1042 = vmul.f32 %v1017, %v1017
          %v1043 = vmul.f32 %v1018, %v1018
          %v1044 = vmul.f32 %v1019, %v1019
          %v1045 = vmul.f32 %v1020, %v1020
          %v1046 = vsel %vm1029, %v1042, 0.0
          %1047 = vadd.xlane.f32.xlu0 %v1046
          %v1048 = vpop.xlane.xlu0 %1047
          %v1049 = vsel %vm1029, %v1043, 0.0
          %1050 = vadd.xlane.f32.xlu0 %v1049
          %v1051 = vpop.xlane.xlu0 %1050
          %v1052 = vsel %vm1029, %v1044, 0.0
          %1053 = vadd.xlane.f32.xlu0 %v1052
          %v1054 = vpop.xlane.xlu0 %1053
          %v1055 = vsel %vm1029, %v1045, 0.0
          %1056 = vadd.xlane.f32.xlu0 %v1055
          %v1057 = vpop.xlane.xlu0 %1056
          %v1058 = vmul.f32 %v1032, 0.0625
          %v1059 = vmul.f32 %v1035, 0.0625
          %v1060 = vmul.f32 %v1038, 0.0625
          %v1061 = vmul.f32 %v1041, 0.0625
          %v1062 = vmul.f32 %v1048, 0.0625
          %v1063 = vmul.f32 %v1051, 0.0625
          %v1064 = vmul.f32 %v1054, 0.0625
          %v1065 = vmul.f32 %v1057, 0.0625
          %v1066 = vmul.f32 %v1058, %v1058
          %v1067 = vmul.f32 %v1059, %v1059
          %v1068 = vmul.f32 %v1060, %v1060
          %v1069 = vmul.f32 %v1061, %v1061
          %v1070 = vsub.f32 %v1062, %v1066
          %v1071 = vsub.f32 %v1063, %v1067
          %v1072 = vsub.f32 %v1064, %v1068
          %v1073 = vsub.f32 %v1065, %v1069
          %v1074 = vmax.f32 %v1070, 0.0
          %v1075 = vmax.f32 %v1071, 0.0
          %v1076 = vmax.f32 %v1072, 0.0
          %v1077 = vmax.f32 %v1073, 0.0
          %v1078 = vsub.f32 %v1017, %v1058
          %v1079 = vsub.f32 %v1018, %v1059
          %v1080 = vsub.f32 %v1019, %v1060
          %v1081 = vsub.f32 %v1020, %v1061
          %v1082 = vsel %vm1029, %v1078, 0.0
          %1083 = vadd.xlane.f32.xlu0 %v1082
          %v1084 = vpop.xlane.xlu0 %1083
          %v1085 = vsel %vm1029, %v1079, 0.0
          %1086 = vadd.xlane.f32.xlu0 %v1085
          %v1087 = vpop.xlane.xlu0 %1086
          %v1088 = vsel %vm1029, %v1080, 0.0
          %1089 = vadd.xlane.f32.xlu0 %v1088
          %v1090 = vpop.xlane.xlu0 %1089
          %v1091 = vsel %vm1029, %v1081, 0.0
          %1092 = vadd.xlane.f32.xlu0 %v1091
          %v1093 = vpop.xlane.xlu0 %1092
          %v1094 = vmul.f32 %v1084, 0.0625
          %v1095 = vmul.f32 %v1087, 0.0625
          %v1096 = vmul.f32 %v1090, 0.0625
          %v1097 = vmul.f32 %v1093, 0.0625
          %v1098 = vmul.f32 %v1025, %v1094
          %v1099 = vmul.f32 %v1026, %v1095
          %v1100 = vmul.f32 %v1027, %v1096
          %v1101 = vmul.f32 %v1028, %v1097
          %v1102 = vadd.f32 %v1074, 1e-05
          %v1103 = vadd.f32 %v1075, 1e-05
          %v1104 = vadd.f32 %v1076, 1e-05
          %v1105 = vadd.f32 %v1077, 1e-05
          %v1106 = vrsqrt.pop %v1102
          %v1107 = vrsqrt.pop %v1103
          %v1108 = vrsqrt.pop %v1104
          %v1109 = vrsqrt.pop %v1105
          %v1110 = vmul.f32 %v1098, %v1106
          %v1111 = vmul.f32 %v1099, %v1107
          %v1112 = vmul.f32 %v1100, %v1108
          %v1113 = vmul.f32 %v1101, %v1109
          %v1114 = vsel %vm1029, %v1021, 0.0
          %1115 = vadd.xlane.f32.xlu0 %v1114
          %v1116 = vpop.xlane.xlu0 %1115
          %v1117 = vsel %vm1029, %v1022, 0.0
          %1118 = vadd.xlane.f32.xlu0 %v1117
          %v1119 = vpop.xlane.xlu0 %1118
          %v1120 = vsel %vm1029, %v1023, 0.0
          %1121 = vadd.xlane.f32.xlu0 %v1120
          %v1122 = vpop.xlane.xlu0 %1121
          %v1123 = vsel %vm1029, %v1024, 0.0
          %1124 = vadd.xlane.f32.xlu0 %v1123
          %v1125 = vpop.xlane.xlu0 %1124
          %v1126 = vmul.f32 %v1021, %v1021
          %v1127 = vmul.f32 %v1022, %v1022
          %v1128 = vmul.f32 %v1023, %v1023
          %v1129 = vmul.f32 %v1024, %v1024
          %v1130 = vsel %vm1029, %v1126, 0.0
          %1131 = vadd.xlane.f32.xlu0 %v1130
          %v1132 = vpop.xlane.xlu0 %1131
          %v1133 = vsel %vm1029, %v1127, 0.0
          %1134 = vadd.xlane.f32.xlu0 %v1133
          %v1135 = vpop.xlane.xlu0 %1134
          %v1136 = vsel %vm1029, %v1128, 0.0
          %1137 = vadd.xlane.f32.xlu0 %v1136
          %v1138 = vpop.xlane.xlu0 %1137
          %v1139 = vsel %vm1029, %v1129, 0.0
          %1140 = vadd.xlane.f32.xlu0 %v1139
          %v1141 = vpop.xlane.xlu0 %1140
          %v1142 = vmul.f32 %v1116, 0.0625
          %v1143 = vmul.f32 %v1119, 0.0625
          %v1144 = vmul.f32 %v1122, 0.0625
          %v1145 = vmul.f32 %v1125, 0.0625
          %v1146 = vmul.f32 %v1132, 0.0625
          %v1147 = vmul.f32 %v1135, 0.0625
          %v1148 = vmul.f32 %v1138, 0.0625
          %v1149 = vmul.f32 %v1141, 0.0625
          %v1150 = vmul.f32 %v1142, %v1142
          %v1151 = vmul.f32 %v1143, %v1143
          %v1152 = vmul.f32 %v1144, %v1144
          %v1153 = vmul.f32 %v1145, %v1145
          %v1154 = vsub.f32 %v1146, %v1150
          %v1155 = vsub.f32 %v1147, %v1151
          %v1156 = vsub.f32 %v1148, %v1152
          %v1157 = vsub.f32 %v1149, %v1153
          %v1158 = vmax.f32 %v1154, 0.0
          %v1159 = vmax.f32 %v1155, 0.0
          %v1160 = vmax.f32 %v1156, 0.0
          %v1161 = vmax.f32 %v1157, 0.0
          %v1162 = vsub.f32 %v1021, %v1142
          %v1163 = vsub.f32 %v1022, %v1143
          %v1164 = vsub.f32 %v1023, %v1144
          %v1165 = vsub.f32 %v1024, %v1145
          %v1166 = vsel %vm1029, %v1162, 0.0
          %1167 = vadd.xlane.f32.xlu0 %v1166
          %v1168 = vpop.xlane.xlu0 %1167
          %v1169 = vsel %vm1029, %v1163, 0.0
          %1170 = vadd.xlane.f32.xlu0 %v1169
          %v1171 = vpop.xlane.xlu0 %1170
          %v1172 = vsel %vm1029, %v1164, 0.0
          %1173 = vadd.xlane.f32.xlu0 %v1172
          %v1174 = vpop.xlane.xlu0 %1173
          %v1175 = vsel %vm1029, %v1165, 0.0
          %1176 = vadd.xlane.f32.xlu0 %v1175
          %v1177 = vpop.xlane.xlu0 %1176
          %v1178 = vmul.f32 %v1168, 0.0625
          %v1179 = vmul.f32 %v1171, 0.0625
          %v1180 = vmul.f32 %v1174, 0.0625
          %v1181 = vmul.f32 %v1177, 0.0625
          %v1182 = vmul.f32 %v1025, %v1178
          %v1183 = vmul.f32 %v1026, %v1179
          %v1184 = vmul.f32 %v1027, %v1180
          %v1185 = vmul.f32 %v1028, %v1181
          %v1186 = vadd.f32 %v1158, 1e-05
          %v1187 = vadd.f32 %v1159, 1e-05
          %v1188 = vadd.f32 %v1160, 1e-05
          %v1189 = vadd.f32 %v1161, 1e-05
          %v1190 = vrsqrt.pop %v1186
          %v1191 = vrsqrt.pop %v1187
          %v1192 = vrsqrt.pop %v1188
          %v1193 = vrsqrt.pop %v1189
          %v1194 = vmul.f32 %v1182, %v1190
          %v1195 = vmul.f32 %v1183, %v1191
          %v1196 = vmul.f32 %v1184, %v1192
          %v1197 = vmul.f32 %v1185, %v1193
          %1202 = vrot.lane.b32.xlu0 %v1194, 127
          %v1203 = vpop.permute.xlu0 %1202
          %1204 = vrot.lane.b32.xlu0 %v1195, 127
          %v1205 = vpop.permute.xlu0 %1204
          %1206 = vrot.lane.b32.xlu0 %v1196, 127
          %v1207 = vpop.permute.xlu0 %1206
          %1208 = vrot.lane.b32.xlu0 %v1197, 127
          %v1209 = vpop.permute.xlu0 %1208
          %v1214 = vsub.f32 %v1110, %v1203
          %v1215 = vsub.f32 %v1111, %v1205
          %v1216 = vsub.f32 %v1112, %v1207
          %v1217 = vsub.f32 %v1113, %v1209
          %1222 = vrot.lane.b32.xlu0 %v1025, 126
          %v1223 = vpop.permute.xlu0 %1222
          %1224 = vrot.lane.b32.xlu0 %v1026, 126
          %v1225 = vpop.permute.xlu0 %1224
          %1226 = vrot.lane.b32.xlu0 %v1027, 126
          %v1227 = vpop.permute.xlu0 %1226
          %1228 = vrot.lane.b32.xlu0 %v1028, 126
          %v1229 = vpop.permute.xlu0 %1228
          %v1234 = vadd.f32 %v1214, %v1223
          %v1235 = vadd.f32 %v1215, %v1225
          %v1236 = vadd.f32 %v1216, %v1227
          %v1237 = vadd.f32 %v1217, %v1229
          %v1238 = vld [vmem:[#allocation2] sm:$0x1]
          %v1239 = vand.u32 2147483647, %v1234
          %v1240 = vand.u32 2147483647, %v1235
          %v1241 = vand.u32 2147483647, %v1236
          %v1242 = vand.u32 2147483647, %v1237
          %vm1243 = vcmask 7168
          %v1244 = vsel %vm1243, %v1239, 0.0
          %v1245 = vsel %vm1243, %v1240, 0.0
          %v1246 = vadd.f32 %v1244, %v1245
          %v1247 = vsel %vm1243, %v1241, 0.0
          %v1248 = vadd.f32 %v1246, %v1247
          %v1249 = vsel %vm1243, %v1242, 0.0
          %v1250 = vadd.f32 %v1248, %v1249
          %1251 = vadd.xlane.f32.xlu0 %v1250
          %v1252 = vpop.xlane.xlu0 %1251
          %v1253 = vrot.slane %v1252, 4
          %v1254 = vadd.f32 %v1252, %v1253
          %v1255 = vrot.slane %v1254, 2
          %v1256 = vadd.f32 %v1254, %v1255
          %v1257 = vrot.slane %v1256, 1
          %v1258 = vadd.f32 %v1256, %v1257
          %s1259 = vtos %v1258
          %v1260 = vstv %s1259
          %v1261 = vmul.f32 %v1260, 0.03125
          %v1262 = vadd.f32 %v1238, %v1261
          %vm1263 = vcmask 0
          %1264 = vst.msk [vmem:[#allocation2] sm:$0x1] %vm1263, %v1262
        $region72: #{tpu_custom_call.1} parent=55 // pred_fallthru
          _
        // Predicated region
        $region73: #{tpu_custom_call.1} parent=55 // pred_check
          %p1265 = pneg %p352
        $region74: #{tpu_custom_call.1} parent=55 // pred_check_branch
          %1267 = sbr.rel (%p1265) target = $region76
        $region75: #{tpu_custom_call.1} parent=55 // pred_region
          %s1269 = ssub.s32 16, 16
          %1270 = vsyncadd [#allocation3], %s1269
          %s1272 = sshll.u32 [#allocation2], 4
          %s1273 = int_to_ptr.vmem [resolvable:$true] %s1272
          %1275 = dma.vmem_to_hbm [thread:$0]  %s1273, 16, %s9, [#allocation3]
        $region76: #{tpu_custom_call.1} parent=55 // pred_fallthru
          _
        // Predicated region
        $region77: #{tpu_custom_call.1} parent=55 // pred_check
          %p1276 = pneg %p352
        $region78: #{tpu_custom_call.1} parent=55 // pred_check_branch
          %1278 = sbr.rel (%p1276) target = $region80
        $region79: #{tpu_custom_call.1} parent=55 // pred_region
          %1279 = dma.done [#allocation3], 16
        $region80: #{tpu_custom_call.1} parent=55 // pred_fallthru
          _
      $region56: #{tpu_custom_call.1} parent=5 // pred_fallthru
        _
      %p1280 = scmp.le.s32.totalorder 2, %s16
      // Predicated region
      $region81: #{tpu_custom_call.1} parent=5 // pred_check
        %p1281 = pneg %p1280
      $region82: #{tpu_custom_call.1} parent=5 // pred_check_branch
        %1283 = sbr.rel (%p1281) target = $region84
      $region83: #{tpu_custom_call.1} parent=5 // pred_region
        %s1284 = ssub.s32 %s16, 2
      $region84: #{tpu_custom_call.1} parent=5 // pred_fallthru
        _
    $region6: #{tpu_custom_call.1} parent=1 // loop_footer
      %s20 = sadd.s32 1, %s16
    $region7: #{tpu_custom_call.1} parent=1 // loop_footer_branch
      %15 = sbr.rel target = $region3
    $region8: #{tpu_custom_call.1} parent=1 // loop_exit
      _
    %1285 = vsyncpa [#allocation3], 1
    %s1286 = scalar_lea.sflag [#allocation3], 1
    %1287 = vsyncpa %s1286, 1

</llo_original>
